<compile_context>
chip_gen: v7x
topology: tpu7x:2x2x1
jax: 0.10.0
libtpu: 0.0.40
codegen_flags: <defaults>
</compile_context>

<pallas_src>
import functools

import jax
import jax.numpy as jnp
from jax import lax
from jax.experimental import pallas as pl
from jax.experimental.pallas import tpu as pltpu


# Tap folding: fold[a][r] = set of 3x3 taps collapsed onto input-resolution tap r of
# output sub-position a.  Upsample(2x, nearest)+conv3x3 == 2x2-footprint conv per
# sub-position; without upsample it is the plain 3-tap conv.
_UPSAMPLE_FOLD = (((0,), (1, 2)), ((0, 1), (2,)))
_IDENTITY_FOLD = (((0,), (1,), (2,)),)


# ---------------------------------------------------------------------------
# Kernels
# ---------------------------------------------------------------------------
def _apply_act(y, act_type):
    if act_type == 'LReLU':
        return jnp.where(y >= 0, y, 0.2 * y)
    if act_type == 'Tanh':
        return jnp.tanh(y)
    return y


def _conv_bn_stats_kernel(a_ref, w_ref, b_ref, y_ref, st_ref, *, nb):
    # a_ref : (NB, H+2, KWIN)   bf16  padded original-resolution rows (whole images)
    # w_ref : (A, R, KWIN, OUTW) f32  folded banded weights (VMEM resident)
    # b_ref : (1, OUTW)          f32  conv bias tiled over output columns
    # y_ref : (A, NB, H, OUTW)   f32  conv + bias (pre-BN), lane-dense
    # st_ref: (1, 2, OUTW)       f32  per-tile (sum, sumsq) per output lane
    A, R = w_ref.shape[0], w_ref.shape[1]
    H = y_ref.shape[2]
    bias = b_ref[...]                                    # (1, OUTW)
    wmats = [[w_ref[a, r] for r in range(R)] for a in range(A)]
    s1 = jnp.zeros_like(bias)
    s2 = jnp.zeros_like(bias)
    for n in range(nb):                                  # static unroll over images
        av = a_ref[n].astype(jnp.float32)                # (H+2, KWIN)
        for a in range(A):                               # output sub-row
            acc = jnp.dot(av[a:a + H], wmats[a][0],
                          preferred_element_type=jnp.float32)
            for r in range(1, R):                        # remaining folded taps
                acc = acc + jnp.dot(av[a + r:a + r + H], wmats[a][r],
                                    preferred_element_type=jnp.float32)
            acc = acc + bias
            y_ref[a, n] = acc
            s1 = s1 + jnp.sum(acc, axis=0, keepdims=True)
            s2 = s2 + jnp.sum(acc * acc, axis=0, keepdims=True)
    st_ref[0, 0:1, :] = s1
    st_ref[0, 1:2, :] = s2


def _conv_act_kernel(a_ref, w_ref, b_ref, o_ref, *, nb, act_type):
    # Fused single-pass path (use_bn=False): conv + bias + activation.
    A, R = w_ref.shape[0], w_ref.shape[1]
    H = o_ref.shape[2]
    bias = b_ref[...]
    wmats = [[w_ref[a, r] for r in range(R)] for a in range(A)]
    for n in range(nb):
        av = a_ref[n].astype(jnp.float32)
        for a in range(A):
            acc = jnp.dot(av[a:a + H], wmats[a][0],
                          preferred_element_type=jnp.float32)
            for r in range(1, R):
                acc = acc + jnp.dot(av[a + r:a + r + H], wmats[a][r],
                                    preferred_element_type=jnp.float32)
            o_ref[a, n] = _apply_act(acc + bias, act_type).astype(o_ref.dtype)


def _bn_act_kernel(y_ref, s_ref, t_ref, o_ref, *, act_type):
    # y_ref/o_ref: (A, NB, H, OUTW) f32 (aliased); s_ref/t_ref: (1, OUTW) f32.
    y = y_ref[...] * s_ref[...] + t_ref[...]
    o_ref[...] = _apply_act(y, act_type).astype(o_ref.dtype)


# ---------------------------------------------------------------------------
# Wrapper helpers
# ---------------------------------------------------------------------------
def _build_bands(conv_w, W, fold):
    """PyTorch (Cout, Cin, 3, 3) -> (A, R, (W+2)*Cin, A*W*Cout) folded banded weights.

    band[a, r][(j+b+c)*Cin + ci, (A*j+b)*Cout + co] =
        sum_{dy in fold[a][r], dx in fold[b][c]} conv_w[co, ci, dy, dx]
    so xpad_row[i+a+r] @ band[a, r], summed over r, is output row A*i + a.
    """
    Cout, Cin, _, _ = conv_w.shape
    wt = jnp.transpose(conv_w, (2, 3, 1, 0)).astype(jnp.float32)   # (dy, dx, Cin, Cout)
    A, R = len(fold), len(fold[0])
    QW = A * W
    j = jnp.arange(W)
    bands = jnp.zeros((A, R, W + 2, Cin, QW, Cout), jnp.float32)
    for a in range(A):
        for r in range(R):
            for b in range(A):
                for c in range(R):
                    v = sum(wt[dy, dx] for dy in fold[a][r] for dx in fold[b][c])
                    bands = bands.at[a, r, j + b + c, :, A * j + b, :].set(
                        jnp.broadcast_to(v, (W, Cin, Cout)))
    return bands.reshape(A, R, (W + 2) * Cin, QW * Cout)


def _vmem_limits():
    """Generation-aware VMEM limit / working-set budget (conservative fallback)."""
    phys = 64 * 1024 * 1024                      # v7x per-core VMEM (smallest case)
    try:
        phys = int(pltpu.get_tpu_info().vmem_capacity_bytes)
    except Exception:
        pass
    limit = max(32 * 1024 * 1024, min(phys // 2, 96 * 1024 * 1024))
    budget = limit // 2                          # double-buffering headroom
    return limit, budget


def _pick_images_per_block(n_images, per_image_bytes, resident_bytes, budget_bytes):
    """Largest divisor of N whose double-buffered working set fits the budget while
    keeping at least 2 grid steps (pipelining + v7x megacore sharding)."""
    best = 1
    for nb in range(1, n_images + 1):
        if n_images % nb:
            continue
        if n_images >= 2 and n_images // nb < 2:
            break
        if resident_bytes + 2 * nb * per_image_bytes <= budget_bytes:
            best = nb
    return best


# ---------------------------------------------------------------------------
# Forward pass (public API is NCHW, matching PyTorch)
# ---------------------------------------------------------------------------
@functools.partial(jax.jit, static_argnames=('use_bn', 'act_type', 'use_upsamp',
                                             'images_per_block', 'act_dtype'))
def decode_block_forward(x_nchw, conv_w, conv_b, bn_gamma, bn_beta, *,
                         use_bn=True, act_type='LReLU', use_upsamp=True,
                         images_per_block=None, act_dtype=jnp.bfloat16):
    N, Cin, H, W = x_nchw.shape
    Cout = conv_w.shape[0]
    fold = _UPSAMPLE_FOLD if use_upsamp else _IDENTITY_FOLD
    A, R = len(fold), len(fold[0])        # sub-rows per input row / taps per sub-row
    QW = A * W                            # output width
    KWIN = (W + 2) * Cin                  # padded input row length (channel-fastest)
    OUTW = QW * Cout                      # lane-dense output row length

    # --- input staging (original resolution only; upsample is folded into weights) ---
    x = jnp.transpose(x_nchw, (0, 2, 3, 1))                        # NCHW -> NHWC
    xp = jnp.pad(x, ((0, 0), (1, 1), (1, 1), (0, 0)))              # zero pad=1
    xp = xp.reshape(N, H + 2, KWIN).astype(act_dtype)              # padded rows, bf16

    bands = _build_bands(conv_w, W, fold)                          # (A,R,KWIN,OUTW) f32
    bias_row = jnp.tile(conv_b.astype(jnp.float32), QW).reshape(1, OUTW)

    # --- generation-aware tiling over images -------------------------------------
    vmem_limit, budget = _vmem_limits()
    per_image = (H + 2) * KWIN * jnp.dtype(act_dtype).itemsize + 2 * A * H * OUTW * 4
    resident = 2 * A * R * KWIN * OUTW * 4 + 4 * OUTW * 4
    NB = images_per_block if images_per_block is not None else \
        _pick_images_per_block(N, per_image, resident, budget)
    assert N % NB == 0, (N, NB)
    num_tiles = N // NB

    cparams = pltpu.CompilerParams(dimension_semantics=("parallel",),
                                   vmem_limit_bytes=vmem_limit)

    in_specs = [
        pl.BlockSpec((NB, H + 2, KWIN), lambda i: (i, 0, 0)),       # whole-image rows
        pl.BlockSpec((A, R, KWIN, OUTW), lambda i: (0, 0, 0, 0)),   # resident weights
        pl.BlockSpec((1, OUTW), lambda i: (0, 0)),                  # resident bias
    ]
    y_spec = pl.BlockSpec((A, NB, H, OUTW), lambda i: (0, i, 0, 0))

    if not use_bn:
        # Single fused pass: conv + bias + activation.
        out4 = pl.pallas_call(
            functools.partial(_conv_act_kernel, nb=NB, act_type=act_type),
            out_shape=jax.ShapeDtypeStruct((A, N, H, OUTW), jnp.float32),
            grid=(num_tiles,),
            in_specs=in_specs,
            out_specs=y_spec,
            compiler_params=cparams,
        )(xp, bands, bias_row)
    else:
        # Pass 1: conv + bias, plus per-tile BN partial sums (merged into one block).
        y, stats = pl.pallas_call(
            functools.partial(_conv_bn_stats_kernel, nb=NB),
            out_shape=(jax.ShapeDtypeStruct((A, N, H, OUTW), jnp.float32),
                       jax.ShapeDtypeStruct((num_tiles, 2, OUTW), jnp.float32)),
            grid=(num_tiles,),
            in_specs=in_specs,
            out_specs=(y_spec, pl.BlockSpec((1, 2, OUTW), lambda i: (i, 0, 0))),
            compiler_params=cparams,
        )(xp, bands, bias_row)

        # Tiny cross-tile reduction + per-channel scale/shift (wrapper side).
        count = jnp.float32(N * A * H * QW)
        s1 = stats[:, 0, :].sum(axis=0).reshape(QW, Cout).sum(axis=0)
        s2 = stats[:, 1, :].sum(axis=0).reshape(QW, Cout).sum(axis=0)
        mean = s1 / count
        var = jnp.maximum(s2 / count - mean * mean, 0.0)
        inv = lax.rsqrt(var + 1e-5)
        scale = bn_gamma.astype(jnp.float32) * inv
        shift = bn_beta.astype(jnp.float32) - mean * scale
        scale_row = jnp.tile(scale, QW).reshape(1, OUTW)
        shift_row = jnp.tile(shift, QW).reshape(1, OUTW)
        # TODO(synk): nn.BatchNorm2d running_mean/running_var buffer updates (training
        # side effect) are not modeled; forward output (batch-stat path) is unaffected.

        # Pass 2: fused BN affine + activation, output aliased onto the intermediate.
        out4 = pl.pallas_call(
            functools.partial(_bn_act_kernel, act_type=act_type),
            out_shape=jax.ShapeDtypeStruct((A, N, H, OUTW), jnp.float32),
            grid=(num_tiles,),
            in_specs=[y_spec,
                      pl.BlockSpec((1, OUTW), lambda i: (0, 0)),
                      pl.BlockSpec((1, OUTW), lambda i: (0, 0))],
            out_specs=y_spec,
            input_output_aliases={0: 0},
            compiler_params=cparams,
        )(y, scale_row, shift_row)

    # (A, N, H, QW, Cout) -> NCHW (N, Cout, A*H, QW); single XLA transpose on exit.
    out = out4.reshape(A, N, H, QW, Cout)
    out = jnp.transpose(out, (1, 4, 2, 0, 3)).reshape(N, Cout, A * H, QW)
    return out


# ---------------------------------------------------------------------------
# Pure-JAX reference (same activation rounding: bf16 inputs, f32 weights/math)
# ---------------------------------------------------------------------------
def decode_block_reference(x_nchw, conv_w, conv_b, bn_gamma, bn_beta, *,
                           use_bn=True, act_type='LReLU', use_upsamp=True,
                           act_dtype=jnp.bfloat16):
    x = x_nchw.astype(act_dtype).astype(jnp.float32)
    if use_upsamp:
        x = jnp.repeat(jnp.repeat(x, 2, axis=2), 2, axis=3)
    y = lax.conv_general_dilated(
        x, conv_w.astype(jnp.float32),
        window_strides=(1, 1), padding=((1, 1), (1, 1)),
        dimension_numbers=('NCHW', 'OIHW', 'NCHW'),
        precision=lax.Precision.HIGHEST,
        preferred_element_type=jnp.float32)
    y = y + conv_b.astype(jnp.float32).reshape(1, -1, 1, 1)
    if use_bn:
        mu = jnp.mean(y, axis=(0, 2, 3), keepdims=True)
        var = jnp.mean((y - mu) ** 2, axis=(0, 2, 3), keepdims=True)
        y = (y - mu) * lax.rsqrt(var + 1e-5) * bn_gamma.reshape(1, -1, 1, 1) \
            + bn_beta.reshape(1, -1, 1, 1)
    if act_type == 'LReLU':
        y = jnp.where(y >= 0, y, 0.2 * y)
    elif act_type == 'Tanh':
        y = jnp.tanh(y)
    return y


if __name__ == "__main__":
    # DecodeBlock(in_feature=4, out_feature=8, use_bn=True, act_type='LReLU', use_upsamp=True)
    IN_FEATURE, OUT_FEATURE = 4, 8
    N, H, W = 2, 8, 8                     # input (2,4,8,8) -> output (2,8,16,16)

    key = jax.random.PRNGKey(0)
    kx, kw, kb, kg, kbe = jax.random.split(key, 5)
    x = jax.random.normal(kx, (N, IN_FEATURE, H, W), dtype=jnp.float32)
    conv_w = 0.1 * jax.random.normal(kw, (OUT_FEATURE, IN_FEATURE, 3, 3), dtype=jnp.float32)
    conv_b = 0.1 * jax.random.normal(kb, (OUT_FEATURE,), dtype=jnp.float32)
    bn_gamma = 1.0 + 0.1 * jax.random.normal(kg, (OUT_FEATURE,), dtype=jnp.float32)
    bn_beta = 0.1 * jax.random.normal(kbe, (OUT_FEATURE,), dtype=jnp.float32)

    configs = [
        dict(use_bn=True,  act_type='LReLU', use_upsamp=True),   # spec'd DecodeBlock config
        dict(use_bn=False, act_type='Tanh',  use_upsamp=True),   # fused single-pass path
        dict(use_bn=True,  act_type='LReLU', use_upsamp=False),  # no-upsample path
    ]
    for cfg in configs:
        out = jax.block_until_ready(
            decode_block_forward(x, conv_w, conv_b, bn_gamma, bn_beta, **cfg))
        ref = jax.block_until_ready(
            decode_block_reference(x, conv_w, conv_b, bn_gamma, bn_beta, **cfg))
        assert out.shape == ref.shape, (cfg, out.shape, ref.shape)
        max_diff = float(jnp.max(jnp.abs(out - ref)))
        assert max_diff < 1e-3, (cfg, max_diff)

    print("KERNEL_OK")
</pallas_src>

<mosaic_0001>
module attributes {stable_mosaic.version = 11 : i64} {
  func.func @_conv_bn_stats_kernel(%arg0: i32, %arg1: memref<1x10x40xbf16, #tpu.memory_space<vmem>>, %arg2: memref<2x2x40x128xf32, #tpu.memory_space<vmem>>, %arg3: memref<1x128xf32, #tpu.memory_space<vmem>>, %arg4: memref<2x1x8x128xf32, #tpu.memory_space<vmem>>, %arg5: memref<1x2x128xf32, #tpu.memory_space<vmem>>) attributes {dimension_semantics = [#tpu.dimension_semantics<parallel>], iteration_bounds = array<i64: 2>, scalar_prefetch = 0 : i64, scratch_operands = 0 : i64, tpu.core_type = #tpu.core_type<tc>, window_params = [{transform_indices = @transform_0, window_bounds = array<i64: 1, 10, 40>}, {pipeline_mode = #tpu.pipeline_mode<synchronous>, transform_indices = @transform_1, window_bounds = array<i64: 2, 2, 40, 128>}, {pipeline_mode = #tpu.pipeline_mode<synchronous>, transform_indices = @transform_2, window_bounds = array<i64: 1, 128>}, {transform_indices = @transform_3, window_bounds = array<i64: 2, 1, 8, 128>}, {transform_indices = @transform_4, window_bounds = array<i64: 1, 2, 128>}]} {
    %c0 = arith.constant 0 : index
    %c0_0 = arith.constant 0 : index
    %0 = vector.load %arg3[%c0, %c0_0] : memref<1x128xf32, #tpu.memory_space<vmem>>, vector<1x128xf32>
    %c0_1 = arith.constant 0 : index
    %c0_2 = arith.constant 0 : index
    %c0_3 = arith.constant 0 : index
    %c0_4 = arith.constant 0 : index
    %1 = vector.load %arg2[%c0_1, %c0_2, %c0_3, %c0_4] : memref<2x2x40x128xf32, #tpu.memory_space<vmem>>, vector<1x1x40x128xf32>
    %2 = vector.shape_cast %1 : vector<1x1x40x128xf32> to vector<40x128xf32>
    %c0_5 = arith.constant 0 : index
    %c1 = arith.constant 1 : index
    %c0_6 = arith.constant 0 : index
    %c0_7 = arith.constant 0 : index
    %3 = vector.load %arg2[%c0_5, %c1, %c0_6, %c0_7] : memref<2x2x40x128xf32, #tpu.memory_space<vmem>>, vector<1x1x40x128xf32>
    %4 = vector.shape_cast %3 : vector<1x1x40x128xf32> to vector<40x128xf32>
    %c1_8 = arith.constant 1 : index
    %c0_9 = arith.constant 0 : index
    %c0_10 = arith.constant 0 : index
    %c0_11 = arith.constant 0 : index
    %5 = vector.load %arg2[%c1_8, %c0_9, %c0_10, %c0_11] : memref<2x2x40x128xf32, #tpu.memory_space<vmem>>, vector<1x1x40x128xf32>
    %6 = vector.shape_cast %5 : vector<1x1x40x128xf32> to vector<40x128xf32>
    %c1_12 = arith.constant 1 : index
    %c1_13 = arith.constant 1 : index
    %c0_14 = arith.constant 0 : index
    %c0_15 = arith.constant 0 : index
    %7 = vector.load %arg2[%c1_12, %c1_13, %c0_14, %c0_15] : memref<2x2x40x128xf32, #tpu.memory_space<vmem>>, vector<1x1x40x128xf32>
    %8 = vector.shape_cast %7 : vector<1x1x40x128xf32> to vector<40x128xf32>
    %cst = arith.constant 0.000000e+00 : f32
    %9 = vector.broadcast %cst : f32 to vector<1x128xf32>
    %cst_16 = arith.constant 0.000000e+00 : f32
    %10 = vector.broadcast %cst_16 : f32 to vector<1x128xf32>
    %c0_17 = arith.constant 0 : index
    %c0_18 = arith.constant 0 : index
    %c0_19 = arith.constant 0 : index
    %11 = vector.load %arg1[%c0_17, %c0_18, %c0_19] : memref<1x10x40xbf16, #tpu.memory_space<vmem>>, vector<1x10x40xbf16>
    %12 = vector.shape_cast %11 : vector<1x10x40xbf16> to vector<10x40xbf16>
    %13 = arith.extf %12 : vector<10x40xbf16> to vector<10x40xf32>
    %14 = vector.extract_strided_slice %13 {offsets = [0, 0], sizes = [8, 40], strides = [1, 1]} : vector<10x40xf32> to vector<8x40xf32>
    %cst_20 = arith.constant dense<0.000000e+00> : vector<8x128xf32>
    %15 = tpu.matmul %14, %2, %cst_20 {dimension_numbers = #tpu.dot_dimension_numbers<[1], [0], [0], [1], [0, 0, 1, 1], [], []>} : vector<8x40xf32>, vector<40x128xf32>, vector<8x128xf32> -> vector<8x128xf32>
    %16 = vector.extract_strided_slice %13 {offsets = [1, 0], sizes = [8, 40], strides = [1, 1]} : vector<10x40xf32> to vector<8x40xf32>
    %cst_21 = arith.constant dense<0.000000e+00> : vector<8x128xf32>
    %17 = tpu.matmul %16, %4, %cst_21 {dimension_numbers = #tpu.dot_dimension_numbers<[1], [0], [0], [1], [0, 0, 1, 1], [], []>} : vector<8x40xf32>, vector<40x128xf32>, vector<8x128xf32> -> vector<8x128xf32>
    %18 = arith.addf %15, %17 : vector<8x128xf32>
    %19 = vector.broadcast %0 : vector<1x128xf32> to vector<8x128xf32>
    %20 = arith.addf %18, %19 : vector<8x128xf32>
    %c0_22 = arith.constant 0 : index
    %c0_23 = arith.constant 0 : index
    %c0_24 = arith.constant 0 : index
    %c0_25 = arith.constant 0 : index
    %21 = vector.load %arg4[%c0_22, %c0_23, %c0_24, %c0_25] : memref<2x1x8x128xf32, #tpu.memory_space<vmem>>, vector<1x1x8x128xf32>
    %22 = vector.shape_cast %21 : vector<1x1x8x128xf32> to vector<8x128xf32>
    %23 = vector.shape_cast %20 : vector<8x128xf32> to vector<1x1x8x128xf32>
    tpu.vector_store %arg4[%c0_22, %c0_23, %c0_24, %c0_25], %23 {strides = array<i32>} : memref<2x1x8x128xf32, #tpu.memory_space<vmem>>, vector<1x1x8x128xf32>,
    %cst_26 = arith.constant dense<0.000000e+00> : vector<128xf32>
    %24 = vector.multi_reduction <add>, %20, %cst_26 [0] : vector<8x128xf32> to vector<128xf32>
    %25 = vector.shape_cast %24 : vector<128xf32> to vector<1x128xf32>
    %26 = arith.addf %9, %25 : vector<1x128xf32>
    %27 = arith.mulf %20, %20 : vector<8x128xf32>
    %cst_27 = arith.constant dense<0.000000e+00> : vector<128xf32>
    %28 = vector.multi_reduction <add>, %27, %cst_27 [0] : vector<8x128xf32> to vector<128xf32>
    %29 = vector.shape_cast %28 : vector<128xf32> to vector<1x128xf32>
    %30 = arith.addf %10, %29 : vector<1x128xf32>
    %31 = vector.extract_strided_slice %13 {offsets = [1, 0], sizes = [8, 40], strides = [1, 1]} : vector<10x40xf32> to vector<8x40xf32>
    %cst_28 = arith.constant dense<0.000000e+00> : vector<8x128xf32>
    %32 = tpu.matmul %31, %6, %cst_28 {dimension_numbers = #tpu.dot_dimension_numbers<[1], [0], [0], [1], [0, 0, 1, 1], [], []>} : vector<8x40xf32>, vector<40x128xf32>, vector<8x128xf32> -> vector<8x128xf32>
    %33 = vector.extract_strided_slice %13 {offsets = [2, 0], sizes = [8, 40], strides = [1, 1]} : vector<10x40xf32> to vector<8x40xf32>
    %cst_29 = arith.constant dense<0.000000e+00> : vector<8x128xf32>
    %34 = tpu.matmul %33, %8, %cst_29 {dimension_numbers = #tpu.dot_dimension_numbers<[1], [0], [0], [1], [0, 0, 1, 1], [], []>} : vector<8x40xf32>, vector<40x128xf32>, vector<8x128xf32> -> vector<8x128xf32>
    %35 = arith.addf %32, %34 : vector<8x128xf32>
    %36 = vector.broadcast %0 : vector<1x128xf32> to vector<8x128xf32>
    %37 = arith.addf %35, %36 : vector<8x128xf32>
    %c1_30 = arith.constant 1 : index
    %c0_31 = arith.constant 0 : index
    %c0_32 = arith.constant 0 : index
    %c0_33 = arith.constant 0 : index
    %38 = vector.load %arg4[%c1_30, %c0_31, %c0_32, %c0_33] : memref<2x1x8x128xf32, #tpu.memory_space<vmem>>, vector<1x1x8x128xf32>
    %39 = vector.shape_cast %38 : vector<1x1x8x128xf32> to vector<8x128xf32>
    %40 = vector.shape_cast %37 : vector<8x128xf32> to vector<1x1x8x128xf32>
    tpu.vector_store %arg4[%c1_30, %c0_31, %c0_32, %c0_33], %40 {strides = array<i32>} : memref<2x1x8x128xf32, #tpu.memory_space<vmem>>, vector<1x1x8x128xf32>,
    %cst_34 = arith.constant dense<0.000000e+00> : vector<128xf32>
    %41 = vector.multi_reduction <add>, %37, %cst_34 [0] : vector<8x128xf32> to vector<128xf32>
    %42 = vector.shape_cast %41 : vector<128xf32> to vector<1x128xf32>
    %43 = arith.addf %26, %42 : vector<1x128xf32>
    %44 = arith.mulf %37, %37 : vector<8x128xf32>
    %cst_35 = arith.constant dense<0.000000e+00> : vector<128xf32>
    %45 = vector.multi_reduction <add>, %44, %cst_35 [0] : vector<8x128xf32> to vector<128xf32>
    %46 = vector.shape_cast %45 : vector<128xf32> to vector<1x128xf32>
    %47 = arith.addf %30, %46 : vector<1x128xf32>
    %c0_36 = arith.constant 0 : index
    %c0_37 = arith.constant 0 : index
    %c0_38 = arith.constant 0 : index
    %48 = vector.load %arg5[%c0_36, %c0_37, %c0_38] : memref<1x2x128xf32, #tpu.memory_space<vmem>>, vector<1x1x128xf32>
    %49 = vector.shape_cast %48 : vector<1x1x128xf32> to vector<1x128xf32>
    %50 = vector.shape_cast %43 : vector<1x128xf32> to vector<1x1x128xf32>
    tpu.vector_store %arg5[%c0_36, %c0_37, %c0_38], %50 {strides = array<i32>} : memref<1x2x128xf32, #tpu.memory_space<vmem>>, vector<1x1x128xf32>,
    %c0_39 = arith.constant 0 : index
    %c1_40 = arith.constant 1 : index
    %c0_41 = arith.constant 0 : index
    %51 = vector.load %arg5[%c0_39, %c1_40, %c0_41] : memref<1x2x128xf32, #tpu.memory_space<vmem>>, vector<1x1x128xf32>
    %52 = vector.shape_cast %51 : vector<1x1x128xf32> to vector<1x128xf32>
    %53 = vector.shape_cast %47 : vector<1x128xf32> to vector<1x1x128xf32>
    tpu.vector_store %arg5[%c0_39, %c1_40, %c0_41], %53 {strides = array<i32>} : memref<1x2x128xf32, #tpu.memory_space<vmem>>, vector<1x1x128xf32>,
    return
  }
  func.func @transform_0(%arg0: i32) -> (i32, i32, i32) {
    %c0_i32 = arith.constant 0 : i32
    %c0_i32_0 = arith.constant 0 : i32
    %c0_i32_1 = arith.constant 0 : i32
    return %arg0, %c0_i32, %c0_i32_0 : i32, i32, i32
  }
  func.func @transform_1(%arg0: i32) -> (i32, i32, i32, i32) {
    %c0_i32 = arith.constant 0 : i32
    %c0_i32_0 = arith.constant 0 : i32
    %c0_i32_1 = arith.constant 0 : i32
    %c0_i32_2 = arith.constant 0 : i32
    %c0_i32_3 = arith.constant 0 : i32
    return %c0_i32, %c0_i32_0, %c0_i32_1, %c0_i32_2 : i32, i32, i32, i32
  }
  func.func @transform_2(%arg0: i32) -> (i32, i32) {
    %c0_i32 = arith.constant 0 : i32
    %c0_i32_0 = arith.constant 0 : i32
    %c0_i32_1 = arith.constant 0 : i32
    return %c0_i32, %c0_i32_0 : i32, i32
  }
  func.func @transform_3(%arg0: i32) -> (i32, i32, i32, i32) {
    %c0_i32 = arith.constant 0 : i32
    %c0_i32_0 = arith.constant 0 : i32
    %c0_i32_1 = arith.constant 0 : i32
    %c0_i32_2 = arith.constant 0 : i32
    return %c0_i32, %arg0, %c0_i32_0, %c0_i32_1 : i32, i32, i32, i32
  }
  func.func @transform_4(%arg0: i32) -> (i32, i32, i32) {
    %c0_i32 = arith.constant 0 : i32
    %c0_i32_0 = arith.constant 0 : i32
    %c0_i32_1 = arith.constant 0 : i32
    return %arg0, %c0_i32, %c0_i32_0 : i32, i32, i32
  }
}

module attributes {stable_mosaic.version = 11 : i64} {
  func.func @_bn_act_kernel(%arg0: i32, %arg1: memref<2x1x8x128xf32, #tpu.memory_space<vmem>>, %arg2: memref<1x128xf32, #tpu.memory_space<vmem>>, %arg3: memref<1x128xf32, #tpu.memory_space<vmem>>, %arg4: memref<2x1x8x128xf32, #tpu.memory_space<vmem>>) attributes {dimension_semantics = [#tpu.dimension_semantics<parallel>], iteration_bounds = array<i64: 2>, scalar_prefetch = 0 : i64, scratch_operands = 0 : i64, tpu.core_type = #tpu.core_type<tc>, window_params = [{transform_indices = @transform_0, window_bounds = array<i64: 2, 1, 8, 128>}, {pipeline_mode = #tpu.pipeline_mode<synchronous>, transform_indices = @transform_1, window_bounds = array<i64: 1, 128>}, {pipeline_mode = #tpu.pipeline_mode<synchronous>, transform_indices = @transform_2, window_bounds = array<i64: 1, 128>}, {transform_indices = @transform_3, window_bounds = array<i64: 2, 1, 8, 128>}]} {
    %c0 = arith.constant 0 : index
    %c0_0 = arith.constant 0 : index
    %c0_1 = arith.constant 0 : index
    %c0_2 = arith.constant 0 : index
    %0 = vector.load %arg1[%c0, %c0_0, %c0_1, %c0_2] : memref<2x1x8x128xf32, #tpu.memory_space<vmem>>, vector<2x1x8x128xf32>
    %c0_3 = arith.constant 0 : index
    %c0_4 = arith.constant 0 : index
    %1 = vector.load %arg2[%c0_3, %c0_4] : memref<1x128xf32, #tpu.memory_space<vmem>>, vector<1x128xf32>
    %2 = vector.shape_cast %1 : vector<1x128xf32> to vector<1x1x1x128xf32>
    %3 = vector.broadcast %2 : vector<1x1x1x128xf32> to vector<2x1x8x128xf32>
    %4 = arith.mulf %0, %3 : vector<2x1x8x128xf32>
    %c0_5 = arith.constant 0 : index
    %c0_6 = arith.constant 0 : index
    %5 = vector.load %arg3[%c0_5, %c0_6] : memref<1x128xf32, #tpu.memory_space<vmem>>, vector<1x128xf32>
    %6 = vector.shape_cast %5 : vector<1x128xf32> to vector<1x1x1x128xf32>
    %7 = vector.broadcast %6 : vector<1x1x1x128xf32> to vector<2x1x8x128xf32>
    %8 = arith.addf %4, %7 : vector<2x1x8x128xf32>
    %cst = arith.constant 0.000000e+00 : f32
    %9 = vector.broadcast %cst : f32 to vector<2x1x8x128xf32>
    %10 = arith.cmpf oge, %8, %9 : vector<2x1x8x128xf32>
    %cst_7 = arith.constant 2.000000e-01 : f32
    %11 = vector.broadcast %cst_7 : f32 to vector<2x1x8x128xf32>
    %12 = arith.mulf %11, %8 : vector<2x1x8x128xf32>
    %13 = arith.select %10, %8, %12 : vector<2x1x8x128xi1>, vector<2x1x8x128xf32>
    %c0_8 = arith.constant 0 : index
    %c0_9 = arith.constant 0 : index
    %c0_10 = arith.constant 0 : index
    %c0_11 = arith.constant 0 : index
    %14 = vector.load %arg4[%c0_8, %c0_9, %c0_10, %c0_11] : memref<2x1x8x128xf32, #tpu.memory_space<vmem>>, vector<2x1x8x128xf32>
    tpu.vector_store %arg4[%c0_8, %c0_9, %c0_10, %c0_11], %13 {strides = array<i32>} : memref<2x1x8x128xf32, #tpu.memory_space<vmem>>, vector<2x1x8x128xf32>,
    return
  }
  func.func @transform_0(%arg0: i32) -> (i32, i32, i32, i32) {
    %c0_i32 = arith.constant 0 : i32
    %c0_i32_0 = arith.constant 0 : i32
    %c0_i32_1 = arith.constant 0 : i32
    %c0_i32_2 = arith.constant 0 : i32
    return %c0_i32, %arg0, %c0_i32_0, %c0_i32_1 : i32, i32, i32, i32
  }
  func.func @transform_1(%arg0: i32) -> (i32, i32) {
    %c0_i32 = arith.constant 0 : i32
    %c0_i32_0 = arith.constant 0 : i32
    %c0_i32_1 = arith.constant 0 : i32
    return %c0_i32, %c0_i32_0 : i32, i32
  }
  func.func @transform_2(%arg0: i32) -> (i32, i32) {
    %c0_i32 = arith.constant 0 : i32
    %c0_i32_0 = arith.constant 0 : i32
    %c0_i32_1 = arith.constant 0 : i32
    return %c0_i32, %c0_i32_0 : i32, i32
  }
  func.func @transform_3(%arg0: i32) -> (i32, i32, i32, i32) {
    %c0_i32 = arith.constant 0 : i32
    %c0_i32_0 = arith.constant 0 : i32
    %c0_i32_1 = arith.constant 0 : i32
    %c0_i32_2 = arith.constant 0 : i32
    return %c0_i32, %arg0, %c0_i32_0, %c0_i32_1 : i32, i32, i32, i32
  }
}

</mosaic_0001>

<llo_original>
// kernel: tile.18
$region0: #{tile.18}
  #allocation0 [shape = 's32[1]{0}', space=sflag, size = 0x4, scoped, tag = 'scoped memory for tile.18']
  %s0 = inlined_call_operand.vmem [shape: f32[8], index: 0, kind: input, shape index: {}]
  %s1 = inlined_call_operand.vmem [shape: f32[16,8], index: 1, kind: output, shape index: {}]
  // Predicated region
  $region2: #{tile.18} parent=0 // pred_check
    _
  $region3: #{tile.18} parent=0 // pred_check_branch
    %3 = sbr.rel (0) target = $region5
  $region4: #{tile.18} parent=0 // pred_region
    _
  $region5: #{tile.18} parent=0 // pred_fallthru
    _
  %v4 = vld [vmem:[%s0] ss:$0 sm:$0xff]
  %5 = vst [vmem:[%s1] sm:$0xff] %v4
  %s6 = scalar_lea.vmem %s1, 8
  %7 = vst [vmem:[%s6] sm:$0xff] %v4

// kernel: tile.19
$region0: #{tile.19}
  %s0 = inlined_call_operand.vmem [shape: f32[16,8], index: 0, kind: input, shape index: {}]
  %s1 = inlined_call_operand.vmem [shape: f32[1,128], index: 1, kind: output, shape index: {}]
  $region1: #{tile.19} parent=0
    #allocation0 [shape = 'u8[4096]{0}', space=vmem, size = 0x1000, scoped, tag = 'scoped mem for output reshape']
    %v2 = vld [vmem:[%s0] sm:$0x1]
    %vm3 = vcmask 64512
    %4 = vst.msk [vmem:[#allocation0] sm:$0x1] %vm3, %v2
    %s5 = scalar_lea.vmem %s0, 15
    %v6 = vld [vmem:[%s5] sm:$0x1]
    %7 = vrot.lane.b32.xlu0 %v6, 120
    %v8 = vpop.permute.xlu0 %7
    %vm9 = vcmask 1048512
    %10 = vst.msk [vmem:[#allocation0] sm:$0x1] %vm9, %v8
    %s11 = scalar_lea.vmem %s0, 14
    %v12 = vld [vmem:[%s11] sm:$0x1]
    %13 = vrot.lane.b32.xlu0 %v12, 112
    %v14 = vpop.permute.xlu0 %13
    %vm15 = vcmask 982912
    %16 = vst.msk [vmem:[#allocation0] sm:$0x1] %vm15, %v14
    %s17 = scalar_lea.vmem %s0, 13
    %v18 = vld [vmem:[%s17] sm:$0x1]
    %19 = vrot.lane.b32.xlu0 %v18, 104
    %v20 = vpop.permute.xlu0 %19
    %vm21 = vcmask 917312
    %22 = vst.msk [vmem:[#allocation0] sm:$0x1] %vm21, %v20
    %s23 = scalar_lea.vmem %s0, 12
    %v24 = vld [vmem:[%s23] sm:$0x1]
    %25 = vrot.lane.b32.xlu0 %v24, 96
    %v26 = vpop.permute.xlu0 %25
    %vm27 = vcmask 851712
    %28 = vst.msk [vmem:[#allocation0] sm:$0x1] %vm27, %v26
    %s29 = scalar_lea.vmem %s0, 11
    %v30 = vld [vmem:[%s29] sm:$0x1]
    %31 = vrot.lane.b32.xlu0 %v30, 88
    %v32 = vpop.permute.xlu0 %31
    %vm33 = vcmask 786112
    %34 = vst.msk [vmem:[#allocation0] sm:$0x1] %vm33, %v32
    %s35 = scalar_lea.vmem %s0, 10
    %v36 = vld [vmem:[%s35] sm:$0x1]
    %37 = vrot.lane.b32.xlu0 %v36, 80
    %v38 = vpop.permute.xlu0 %37
    %vm39 = vcmask 720512
    %40 = vst.msk [vmem:[#allocation0] sm:$0x1] %vm39, %v38
    %s41 = scalar_lea.vmem %s0, 9
    %v42 = vld [vmem:[%s41] sm:$0x1]
    %43 = vrot.lane.b32.xlu0 %v42, 72
    %v44 = vpop.permute.xlu0 %43
    %vm45 = vcmask 654912
    %46 = vst.msk [vmem:[#allocation0] sm:$0x1] %vm45, %v44
    %s47 = scalar_lea.vmem %s0, 8
    %v48 = vld [vmem:[%s47] sm:$0x1]
    %49 = vrot.lane.b32.xlu0 %v48, 64
    %v50 = vpop.permute.xlu0 %49
    %vm51 = vcmask 589312
    %52 = vst.msk [vmem:[#allocation0] sm:$0x1] %vm51, %v50
    %s53 = scalar_lea.vmem %s0, 7
    %v54 = vld [vmem:[%s53] sm:$0x1]
    %55 = vrot.lane.b32.xlu0 %v54, 56
    %v56 = vpop.permute.xlu0 %55
    %vm57 = vcmask 523712
    %58 = vst.msk [vmem:[#allocation0] sm:$0x1] %vm57, %v56
    %s59 = scalar_lea.vmem %s0, 6
    %v60 = vld [vmem:[%s59] sm:$0x1]
    %61 = vrot.lane.b32.xlu0 %v60, 48
    %v62 = vpop.permute.xlu0 %61
    %vm63 = vcmask 458112
    %64 = vst.msk [vmem:[#allocation0] sm:$0x1] %vm63, %v62
    %s65 = scalar_lea.vmem %s0, 5
    %v66 = vld [vmem:[%s65] sm:$0x1]
    %67 = vrot.lane.b32.xlu0 %v66, 40
    %v68 = vpop.permute.xlu0 %67
    %vm69 = vcmask 392512
    %70 = vst.msk [vmem:[#allocation0] sm:$0x1] %vm69, %v68
    %s71 = scalar_lea.vmem %s0, 4
    %v72 = vld [vmem:[%s71] sm:$0x1]
    %73 = vrot.lane.b32.xlu0 %v72, 32
    %v74 = vpop.permute.xlu0 %73
    %vm75 = vcmask 326912
    %76 = vst.msk [vmem:[#allocation0] sm:$0x1] %vm75, %v74
    %s77 = scalar_lea.vmem %s0, 3
    %v78 = vld [vmem:[%s77] sm:$0x1]
    %79 = vrot.lane.b32.xlu0 %v78, 24
    %v80 = vpop.permute.xlu0 %79
    %vm81 = vcmask 261312
    %82 = vst.msk [vmem:[#allocation0] sm:$0x1] %vm81, %v80
    %s83 = scalar_lea.vmem %s0, 2
    %v84 = vld [vmem:[%s83] sm:$0x1]
    %85 = vrot.lane.b32.xlu0 %v84, 16
    %v86 = vpop.permute.xlu0 %85
    %vm87 = vcmask 195712
    %88 = vst.msk [vmem:[#allocation0] sm:$0x1] %vm87, %v86
    %s89 = scalar_lea.vmem %s0, 1
    %v90 = vld [vmem:[%s89] sm:$0x1]
    %91 = vrot.lane.b32.xlu0 %v90, 8
    %v92 = vpop.permute.xlu0 %91
    %vm93 = vcmask 130112
    %94 = vst.msk [vmem:[#allocation0] sm:$0x1] %vm93, %v92
    %s96 = sshllo.u32 0, 1
    %v98 = vld [vmem:[#allocation0] sm:%s96]
    %s99 = sshllo.u32 0, 1
    %100 = vst [vmem:[%s1] sm:%s99] %v98

// kernel: decode_block_forward.3
$region0: #{decode_block_forward.3}
  #allocation0 [shape = 'u32[]', space=smem, size = 0x4, offset = 0x4, fixed_abs, tag = 'smem constant byte address 0x4 - core index']
  #allocation1 [shape = 'u32[144,128]{1,0:T(1,128)}', space=vmem, size = 0x12000, scoped, tag = 'internal scratch']
  %s0 = inlined_call_operand.vmem [shape: f32[2,2,8,128], index: 0, kind: input, shape index: {}, may-alias: {0,3}]
  %s1 = inlined_call_operand.vmem [shape: f32[1,128], index: 1, kind: input, shape index: {}]
  %s2 = inlined_call_operand.vmem [shape: f32[1,128], index: 2, kind: input, shape index: {}]
  %s3 = inlined_call_operand.vmem [shape: f32[2,2,8,128], index: 3, kind: output, shape index: {}, may-alias: {0,3}]
  %s4 = sld [smem:[#allocation0]]
  $region117: #{decode_block_forward.3} parent=0
    _
  %s6 = ssub.s32 1, %s4
  %s7 = scalar_select 0, %s6, %s4
  $region1: #{decode_block_forward.3} parent=0
    #allocation2 [shape = 'u8[16384]{0}', space=vmem, size = 0x4000, scoped, tag = 'input window, operand 0']
    #allocation3 [shape = 'u8[16384]{0}', space=vmem, size = 0x4000, scoped, tag = 'output window, operand 0']
    loop: start=0, step=1, limit=4
    $region2: #{decode_block_forward.3} parent=1 // loop_pre_header
      _
    $region3: #{decode_block_forward.3} parent=1 // loop_header
      %s9 = sphi 0, %s13
      %p10 = scmp.ge.s32.totalorder %s9, 4
      %s19 = sphi 0, %s21
      %s22 = sphi 0, %s19
      %s23 = sphi 0, %s22
      %s39 = sphi 0, %s23
      %s43 = sphi 0, %s43
      %s45 = sphi 0, %s43
      %s46 = sphi 0, %s45
      %s60 = sphi 0, %s46
      %s64 = sphi 0, %s64
      %s66 = sphi 0, %s64
      %s67 = sphi 0, %s66
      %s81 = sphi 0, %s67
      %s87 = sphi 0, %s89
      %s90 = sphi 0, %s87
      %s91 = sphi 0, %s90
      %s107 = sphi 0, %s91
    $region4: #{decode_block_forward.3} parent=1 // loop_header_branch
      %12 = sbr.rel (%p10) target = $region8
    $region5: #{decode_block_forward.3} parent=1 // loop_body
      %s14 = ssub.s32 %s9, 1
      %s15 = ssub.s32 %s9, 2
      %s16 = sadd.s32 %s9, 1
      %s17 = ssub.s32 %s9, %s16
      %p18 = scmp.eq.s32.totalorder %s17, 0
      %s20 = sadd.s32 %s19, 1
      %s21 = scalar_select %p18, %s19, %s20
      %p24 = pneg %p18
      %p25 = scmp.eq.s32.totalorder %s9, 1
      %p26 = por %p24, %p25
      %p27 = scmp.ne.s32.totalorder %s19, %s22
      %p28 = scmp.eq.s32.totalorder %s9, 0
      %p29 = por %p27, %p28
      %p30 = scmp.ne.s32.totalorder %s19, %s22
      %p31 = scmp.eq.s32.totalorder %s14, 1
      %p32 = por %p30, %p31
      %p33 = scmp.ne.s32.totalorder %s22, %s23
      %p34 = scmp.eq.s32.totalorder %s14, 0
      %p35 = por %p33, %p34
      %p36 = scmp.ne.s32.totalorder %s22, %s23
      %p37 = scmp.eq.s32.totalorder %s15, 1
      %p38 = por %p36, %p37
      %p40 = scmp.ne.s32.totalorder %s23, %s39
      %p41 = scmp.eq.s32.totalorder %s15, 0
      %p42 = por %p40, %p41
      %s44 = sadd.s32 %s43, 1
      %p47 = scmp.eq.s32.totalorder %s9, 1
      %p48 = scmp.ne.s32.totalorder %s43, %s45
      %p49 = scmp.eq.s32.totalorder %s9, 0
      %p50 = por %p48, %p49
      %p51 = scmp.ne.s32.totalorder %s43, %s45
      %p52 = scmp.eq.s32.totalorder %s14, 1
      %p53 = por %p51, %p52
      %p54 = scmp.ne.s32.totalorder %s45, %s46
      %p55 = scmp.eq.s32.totalorder %s14, 0
      %p56 = por %p54, %p55
      %p57 = scmp.ne.s32.totalorder %s45, %s46
      %p58 = scmp.eq.s32.totalorder %s15, 1
      %p59 = por %p57, %p58
      %p61 = scmp.ne.s32.totalorder %s46, %s60
      %p62 = scmp.eq.s32.totalorder %s15, 0
      %p63 = por %p61, %p62
      %s65 = sadd.s32 %s64, 1
      %p68 = scmp.eq.s32.totalorder %s9, 1
      %p69 = scmp.ne.s32.totalorder %s64, %s66
      %p70 = scmp.eq.s32.totalorder %s9, 0
      %p71 = por %p69, %p70
      %p72 = scmp.ne.s32.totalorder %s64, %s66
      %p73 = scmp.eq.s32.totalorder %s14, 1
      %p74 = por %p72, %p73
      %p75 = scmp.ne.s32.totalorder %s66, %s67
      %p76 = scmp.eq.s32.totalorder %s14, 0
      %p77 = por %p75, %p76
      %p78 = scmp.ne.s32.totalorder %s66, %s67
      %p79 = scmp.eq.s32.totalorder %s15, 1
      %p80 = por %p78, %p79
      %p82 = scmp.ne.s32.totalorder %s67, %s81
      %p83 = scmp.eq.s32.totalorder %s15, 0
      %p84 = por %p82, %p83
      %s85 = ssub.s32 %s9, %s16
      %p86 = scmp.eq.s32.totalorder %s85, 0
      %s88 = sadd.s32 %s87, 1
      %s89 = scalar_select %p86, %s87, %s88
      %p92 = pneg %p86
      %p93 = scmp.eq.s32.totalorder %s9, 1
      %p94 = por %p92, %p93
      %p95 = scmp.ne.s32.totalorder %s87, %s90
      %p96 = scmp.eq.s32.totalorder %s9, 0
      %p97 = por %p95, %p96
      %p98 = scmp.ne.s32.totalorder %s87, %s90
      %p99 = scmp.eq.s32.totalorder %s14, 1
      %p100 = por %p98, %p99
      %p101 = scmp.ne.s32.totalorder %s90, %s91
      %p102 = scmp.eq.s32.totalorder %s14, 0
      %p103 = por %p101, %p102
      %p104 = scmp.ne.s32.totalorder %s90, %s91
      %p105 = scmp.eq.s32.totalorder %s15, 1
      %p106 = por %p104, %p105
      %p108 = scmp.ne.s32.totalorder %s91, %s107
      %p109 = scmp.eq.s32.totalorder %s15, 0
      %p110 = por %p108, %p109
      %p111 = scmp.le.s32.totalorder 1, %s9
      %p112 = scmp.lt.s32.totalorder %s9, 3
      %p113 = pnand %p111, %p112
      %p114 = pneg %p113
      // Predicated region
      $region9: #{decode_block_forward.3} parent=5 // pred_check
        _
      $region10: #{decode_block_forward.3} parent=5 // pred_check_branch
        %116 = sbr.rel (%p113) target = $region12
      $region11: #{decode_block_forward.3} parent=5 // pred_region
        %s117 = ssub.s32 %s9, 1
        // Predicated region
        $region13: #{decode_block_forward.3} parent=11 // pred_check
          %p118 = pneg %p56
        $region14: #{decode_block_forward.3} parent=11 // pred_check_branch
          %120 = sbr.rel (%p118) target = $region16
        $region15: #{decode_block_forward.3} parent=11 // pred_region
          _
        $region16: #{decode_block_forward.3} parent=11 // pred_fallthru
          _
        // Predicated region
        $region17: #{decode_block_forward.3} parent=11 // pred_check
          %p121 = pneg %p77
        $region18: #{decode_block_forward.3} parent=11 // pred_check_branch
          %123 = sbr.rel (%p121) target = $region20
        $region19: #{decode_block_forward.3} parent=11 // pred_region
          _
        $region20: #{decode_block_forward.3} parent=11 // pred_fallthru
          _
      $region12: #{decode_block_forward.3} parent=5 // pred_fallthru
        _
      %p124 = scmp.lt.s32.totalorder %s9, 2
      // Predicated region
      $region21: #{decode_block_forward.3} parent=5 // pred_check
        %p125 = pneg %p124
      $region22: #{decode_block_forward.3} parent=5 // pred_check_branch
        %127 = sbr.rel (%p125) target = $region24
      $region23: #{decode_block_forward.3} parent=5 // pred_region
        // Predicated region
        $region25: #{decode_block_forward.3} parent=23 // pred_check
          %p128 = pneg %p29
        $region26: #{decode_block_forward.3} parent=23 // pred_check_branch
          %130 = sbr.rel (%p128) target = $region28
        $region27: #{decode_block_forward.3} parent=23 // pred_region
          %s131 = sand.u32 %s19, 1
          %s132 = sand.u32 %s19, 1
          %s133 = smul.addr %s132, 16
          %s134 = scalar_lea.vmem [#allocation2], %s133
          %s135 = smul.addr %s9, 8
          %s136 = scalar_lea.vmem %s0, %s135
          // Predicated region
          $region29: #{decode_block_forward.3} parent=27 // pred_check
            _
          $region30: #{decode_block_forward.3} parent=27 // pred_check_branch
            %138 = sbr.rel (0) target = $region32
          $region31: #{decode_block_forward.3} parent=27 // pred_region
            // Predicated region
            $region33: #{decode_block_forward.3} parent=31 // pred_check
              _
            $region34: #{decode_block_forward.3} parent=31 // pred_check_branch
              %140 = sbr.rel (0) target = $region36
            $region35: #{decode_block_forward.3} parent=31 // pred_region
              // Predicated region
              $region48: #{decode_block_forward.3} parent=35 // pred_check
                _
              $region49: #{decode_block_forward.3} parent=35 // pred_check_branch
                %157 = sbr.rel (0) target = $region51
              $region50: #{decode_block_forward.3} parent=35 // pred_region
                loop: start=0, step=1, limit=1
                $region52: #{decode_block_forward.3} parent=50 // loop_pre_header
                  _
                $region53: #{decode_block_forward.3} parent=50 // loop_header
                  %s159 = sphi 0, %s163
                  %p160 = scmp.ge.s32.totalorder %s159, 1
                  %s164 = sphi %s136, %s136
                  %s165 = sphi %s134, %s134
                $region54: #{decode_block_forward.3} parent=50 // loop_header_branch
                  %162 = sbr.rel (%p160) target = $region58
                $region55: #{decode_block_forward.3} parent=50 // loop_body
                  %v166 = vld [vmem:[%s164] sm:$0xff]
                  %167 = vst [vmem:[%s165] sm:$0xff] %v166
                  %v168 = vld [vmem:[%s164 + $0x10] sm:$0xff]
                  %169 = vst [vmem:[%s165 + $0x8] sm:$0xff] %v168
                $region56: #{decode_block_forward.3} parent=50 // loop_footer
                  %s163 = sadd.s32 1, %s159
                $region57: #{decode_block_forward.3} parent=50 // loop_footer_branch
                  %158 = sbr.rel target = $region53
                $region58: #{decode_block_forward.3} parent=50 // loop_exit
                  _
              $region51: #{decode_block_forward.3} parent=35 // pred_fallthru
                _
              // Predicated region
              $region59: #{decode_block_forward.3} parent=35 // pred_check
                _
              $region60: #{decode_block_forward.3} parent=35 // pred_check_branch
                %171 = sbr.rel target = $region62
              $region61: #{decode_block_forward.3} parent=35 // pred_region
                _
              $region62: #{decode_block_forward.3} parent=35 // pred_fallthru
                _
            $region36: #{decode_block_forward.3} parent=31 // pred_fallthru
              _
            // Predicated region
            $region37: #{decode_block_forward.3} parent=31 // pred_check
              _
            $region38: #{decode_block_forward.3} parent=31 // pred_check_branch
              %142 = sbr.rel target = $region40
            $region39: #{decode_block_forward.3} parent=31 // pred_region
              loop: start=0, step=1, limit=1
              $region41: #{decode_block_forward.3} parent=39 // loop_pre_header
                _
              $region42: #{decode_block_forward.3} parent=39 // loop_header
                %s145 = sphi 0, %s149
                %p146 = scmp.ge.s32.totalorder %s145, 1
                %s150 = sphi %s136, %s136
                %s151 = sphi %s134, %s134
              $region43: #{decode_block_forward.3} parent=39 // loop_header_branch
                %148 = sbr.rel (%p146) target = $region47
              $region44: #{decode_block_forward.3} parent=39 // loop_body
                %v152 = vld [vmem:[%s150] sm:$0xff]
                %153 = vst [vmem:[%s151] sm:$0xff] %v152
                %v154 = vld [vmem:[%s150 + $0x10] sm:$0xff]
                %155 = vst [vmem:[%s151 + $0x8] sm:$0xff] %v154
              $region45: #{decode_block_forward.3} parent=39 // loop_footer
                %s149 = sadd.s32 1, %s145
              $region46: #{decode_block_forward.3} parent=39 // loop_footer_branch
                %144 = sbr.rel target = $region42
              $region47: #{decode_block_forward.3} parent=39 // loop_exit
                _
            $region40: #{decode_block_forward.3} parent=31 // pred_fallthru
              _
          $region32: #{decode_block_forward.3} parent=27 // pred_fallthru
            _
          %172 = vnop
        $region28: #{decode_block_forward.3} parent=23 // pred_fallthru
          _
      $region24: #{decode_block_forward.3} parent=5 // pred_fallthru
        _
      %p173 = scmp.le.s32.totalorder 1, %s9
      %p174 = scmp.lt.s32.totalorder %s9, 3
      %p175 = pnand %p173, %p174
      %p176 = pneg %p175
      // Predicated region
      $region63: #{decode_block_forward.3} parent=5 // pred_check
        _
      $region64: #{decode_block_forward.3} parent=5 // pred_check_branch
        %178 = sbr.rel (%p175) target = $region66
      $region65: #{decode_block_forward.3} parent=5 // pred_region
        %s179 = ssub.s32 %s9, 1
        %s180 = sand.u32 %s22, 1
        %s181 = sand.u32 %s22, 1
        %s182 = smul.addr %s181, 16
        %s183 = scalar_lea.vmem [#allocation2], %s182
        // Predicated region
        $region67: #{decode_block_forward.3} parent=65 // pred_check
          %p184 = pneg %p35
        $region68: #{decode_block_forward.3} parent=65 // pred_check_branch
          %186 = sbr.rel (%p184) target = $region70
        $region69: #{decode_block_forward.3} parent=65 // pred_region
          _
        $region70: #{decode_block_forward.3} parent=65 // pred_fallthru
          _
        %s187 = sand.u32 %s22, 1
        %s188 = sand.u32 %s22, 1
        %s189 = smul.addr %s188, 16
        %s190 = scalar_lea.vmem [#allocation2], %s189
        %p191 = pneg %p35
        %p192 = pneg %p32
        %p193 = pneg %p56
        %p194 = pneg %p53
        %p195 = pneg %p77
        %p196 = pneg %p74
        %p197 = pneg %p103
        %p198 = pneg %p100
        %s199 = sand.u32 %s90, 1
        %s200 = sand.u32 %s90, 1
        %s201 = smul.addr %s200, 16
        %s202 = scalar_lea.vmem [#allocation3], %s201
        %v203 = vld [vmem:[%s183] sm:$0xff]
        %v204 = vld [vmem:[%s183 + $0x8] sm:$0xff]
        %v205 = vld [vmem:[%s1] sm:$0x1]
        %v207 = vlaneseq
        %v208 = vshrl.u32 %v207, 7
        %v209 = vsub.s32 0, %v208
        %v210 = vrot.slane %v205, %v209
        %v212 = vmul.f32 %v203, %v210
        %v213 = vmul.f32 %v204, %v210
        %v214 = vld [vmem:[%s2] sm:$0x1]
        %v216 = vlaneseq
        %v217 = vshrl.u32 %v216, 7
        %v218 = vsub.s32 0, %v217
        %v219 = vrot.slane %v214, %v218
        %v221 = vadd.f32 %v212, %v219
        %v222 = vadd.f32 %v213, %v219
        %vm223 = vcmp.ge.f32.partialorder %v221, 0.0
        %vm224 = vcmp.ge.f32.partialorder %v222, 0.0
        %v225 = vmul.f32 %v221, 0.2
        %v226 = vmul.f32 %v222, 0.2
        %v227 = vsel %vm223, %v221, %v225
        %v228 = vsel %vm224, %v222, %v226
        %229 = vst [vmem:[%s202] sm:$0xff] %v227
        %230 = vst [vmem:[%s202 + $0x8] sm:$0xff] %v228
        %s231 = sand.u32 %s90, 1
        %s232 = sand.u32 %s90, 1
        %s233 = smul.addr %s232, 16
        %s234 = scalar_lea.vmem [#allocation3], %s233
        // Predicated region
        $region71: #{decode_block_forward.3} parent=65 // pred_check
          %p235 = pneg %p100
        $region72: #{decode_block_forward.3} parent=65 // pred_check_branch
          %237 = sbr.rel (%p235) target = $region74
        $region73: #{decode_block_forward.3} parent=65 // pred_region
          %s238 = smul.addr %s14, 8
          %s239 = scalar_lea.vmem %s3, %s238
          // Predicated region
          $region75: #{decode_block_forward.3} parent=73 // pred_check
            _
          $region76: #{decode_block_forward.3} parent=73 // pred_check_branch
            %241 = sbr.rel (0) target = $region78
          $region77: #{decode_block_forward.3} parent=73 // pred_region
            // Predicated region
            $region79: #{decode_block_forward.3} parent=77 // pred_check
              _
            $region80: #{decode_block_forward.3} parent=77 // pred_check_branch
              %243 = sbr.rel (0) target = $region82
            $region81: #{decode_block_forward.3} parent=77 // pred_region
              // Predicated region
              $region94: #{decode_block_forward.3} parent=81 // pred_check
                _
              $region95: #{decode_block_forward.3} parent=81 // pred_check_branch
                %260 = sbr.rel (0) target = $region97
              $region96: #{decode_block_forward.3} parent=81 // pred_region
                loop: start=0, step=1, limit=1
                $region98: #{decode_block_forward.3} parent=96 // loop_pre_header
                  _
                $region99: #{decode_block_forward.3} parent=96 // loop_header
                  %s262 = sphi 0, %s266
                  %p263 = scmp.ge.s32.totalorder %s262, 1
                  %s267 = sphi %s234, %s234
                  %s268 = sphi %s239, %s239
                $region100: #{decode_block_forward.3} parent=96 // loop_header_branch
                  %265 = sbr.rel (%p263) target = $region104
                $region101: #{decode_block_forward.3} parent=96 // loop_body
                  %v269 = vld [vmem:[%s267] sm:$0xff]
                  %270 = vst [vmem:[%s268] sm:$0xff] %v269
                  %v271 = vld [vmem:[%s267 + $0x8] sm:$0xff]
                  %272 = vst [vmem:[%s268 + $0x10] sm:$0xff] %v271
                $region102: #{decode_block_forward.3} parent=96 // loop_footer
                  %s266 = sadd.s32 1, %s262
                $region103: #{decode_block_forward.3} parent=96 // loop_footer_branch
                  %261 = sbr.rel target = $region99
                $region104: #{decode_block_forward.3} parent=96 // loop_exit
                  _
              $region97: #{decode_block_forward.3} parent=81 // pred_fallthru
                _
              // Predicated region
              $region105: #{decode_block_forward.3} parent=81 // pred_check
                _
              $region106: #{decode_block_forward.3} parent=81 // pred_check_branch
                %274 = sbr.rel target = $region108
              $region107: #{decode_block_forward.3} parent=81 // pred_region
                _
              $region108: #{decode_block_forward.3} parent=81 // pred_fallthru
                _
            $region82: #{decode_block_forward.3} parent=77 // pred_fallthru
              _
            // Predicated region
            $region83: #{decode_block_forward.3} parent=77 // pred_check
              _
            $region84: #{decode_block_forward.3} parent=77 // pred_check_branch
              %245 = sbr.rel target = $region86
            $region85: #{decode_block_forward.3} parent=77 // pred_region
              loop: start=0, step=1, limit=1
              $region87: #{decode_block_forward.3} parent=85 // loop_pre_header
                _
              $region88: #{decode_block_forward.3} parent=85 // loop_header
                %s248 = sphi 0, %s252
                %p249 = scmp.ge.s32.totalorder %s248, 1
                %s253 = sphi %s234, %s234
                %s254 = sphi %s239, %s239
              $region89: #{decode_block_forward.3} parent=85 // loop_header_branch
                %251 = sbr.rel (%p249) target = $region93
              $region90: #{decode_block_forward.3} parent=85 // loop_body
                %v255 = vld [vmem:[%s253] sm:$0xff]
                %256 = vst [vmem:[%s254] sm:$0xff] %v255
                %v257 = vld [vmem:[%s253 + $0x8] sm:$0xff]
                %258 = vst [vmem:[%s254 + $0x10] sm:$0xff] %v257
              $region91: #{decode_block_forward.3} parent=85 // loop_footer
                %s252 = sadd.s32 1, %s248
              $region92: #{decode_block_forward.3} parent=85 // loop_footer_branch
                %247 = sbr.rel target = $region88
              $region93: #{decode_block_forward.3} parent=85 // loop_exit
                _
            $region86: #{decode_block_forward.3} parent=77 // pred_fallthru
              _
          $region78: #{decode_block_forward.3} parent=73 // pred_fallthru
            _
          %275 = vnop
        $region74: #{decode_block_forward.3} parent=65 // pred_fallthru
          _
      $region66: #{decode_block_forward.3} parent=5 // pred_fallthru
        _
      %p276 = scmp.le.s32.totalorder 2, %s9
      // Predicated region
      $region109: #{decode_block_forward.3} parent=5 // pred_check
        %p277 = pneg %p276
      $region110: #{decode_block_forward.3} parent=5 // pred_check_branch
        %279 = sbr.rel (%p277) target = $region112
      $region111: #{decode_block_forward.3} parent=5 // pred_region
        %s280 = ssub.s32 %s9, 2
        // Predicated region
        $region113: #{decode_block_forward.3} parent=111 // pred_check
          %p281 = pneg %p106
        $region114: #{decode_block_forward.3} parent=111 // pred_check_branch
          %283 = sbr.rel (%p281) target = $region116
        $region115: #{decode_block_forward.3} parent=111 // pred_region
          %s284 = sand.u32 %s91, 1
          %s285 = sand.u32 %s91, 1
          %s286 = smul.addr %s285, 16
          %s287 = scalar_lea.vmem [#allocation3], %s286
        $region116: #{decode_block_forward.3} parent=111 // pred_fallthru
          _
      $region112: #{decode_block_forward.3} parent=5 // pred_fallthru
        _
    $region6: #{decode_block_forward.3} parent=1 // loop_footer
      %s13 = sadd.s32 1, %s9
    $region7: #{decode_block_forward.3} parent=1 // loop_footer_branch
      %8 = sbr.rel target = $region3
    $region8: #{decode_block_forward.3} parent=1 // loop_exit
      _

// kernel: decode_block_forward.2
$region0: #{decode_block_forward.2}
  #allocation0 [shape = 'u32[]', space=smem, size = 0x4, offset = 0x4, fixed_abs, tag = 'smem constant byte address 0x4 - core index']
  #allocation1 [shape = 'u32[144,128]{1,0:T(1,128)}', space=vmem, size = 0x12000, scoped, tag = 'internal scratch']
  %s0 = inlined_call_operand.vmem [shape: bf16[2,10,40], index: 0, kind: input, shape index: {}]
  %s1 = inlined_call_operand.vmem [shape: f32[2,2,40,128], index: 1, kind: input, shape index: {}]
  %s2 = inlined_call_operand.vmem [shape: f32[1,128], index: 2, kind: input, shape index: {}]
  %s3 = inlined_call_operand.vmem [shape: f32[2,2,8,128], index: 3, kind: output, shape index: {0}]
  %s4 = inlined_call_operand.vmem [shape: f32[2,2,128], index: 4, kind: output, shape index: {1}]
  %5 = xla_tuple %s3, %s4
  %s6 = sld [smem:[#allocation0]]
  $region87: #{decode_block_forward.2} parent=0
    _
  %s8 = ssub.s32 1, %s6
  %s9 = scalar_select 0, %s8, %s6
  $region1: #{decode_block_forward.2} parent=0
    #allocation2 [shape = 'u8[16384]{0}', space=vmem, size = 0x4000, scoped, tag = 'output window, operand 0']
    loop: start=0, step=1, limit=4
    $region2: #{decode_block_forward.2} parent=1 // loop_pre_header
      _
    $region3: #{decode_block_forward.2} parent=1 // loop_header
      %s11 = sphi 0, %s15
      %p12 = scmp.ge.s32.totalorder %s11, 4
      %s21 = sphi 0, %s23
      %s24 = sphi 0, %s21
      %s25 = sphi 0, %s24
      %s41 = sphi 0, %s25
      %s45 = sphi 0, %s45
      %s47 = sphi 0, %s45
      %s48 = sphi 0, %s47
      %s62 = sphi 0, %s48
      %s66 = sphi 0, %s66
      %s68 = sphi 0, %s66
      %s69 = sphi 0, %s68
      %s83 = sphi 0, %s69
      %s89 = sphi 0, %s91
      %s92 = sphi 0, %s89
      %s93 = sphi 0, %s92
      %s109 = sphi 0, %s93
      %s115 = sphi 0, %s117
      %s118 = sphi 0, %s115
      %s119 = sphi 0, %s118
      %s135 = sphi 0, %s119
    $region4: #{decode_block_forward.2} parent=1 // loop_header_branch
      %14 = sbr.rel (%p12) target = $region8
    $region5: #{decode_block_forward.2} parent=1 // loop_body
      %s16 = ssub.s32 %s11, 1
      %s17 = ssub.s32 %s11, 2
      %s18 = sadd.s32 %s11, 1
      %s19 = ssub.s32 %s11, %s18
      %p20 = scmp.eq.s32.totalorder %s19, 0
      %s22 = sadd.s32 %s21, 1
      %s23 = scalar_select %p20, %s21, %s22
      %p26 = pneg %p20
      %p27 = scmp.eq.s32.totalorder %s11, 1
      %p28 = por %p26, %p27
      %p29 = scmp.ne.s32.totalorder %s21, %s24
      %p30 = scmp.eq.s32.totalorder %s11, 0
      %p31 = por %p29, %p30
      %p32 = scmp.ne.s32.totalorder %s21, %s24
      %p33 = scmp.eq.s32.totalorder %s16, 1
      %p34 = por %p32, %p33
      %p35 = scmp.ne.s32.totalorder %s24, %s25
      %p36 = scmp.eq.s32.totalorder %s16, 0
      %p37 = por %p35, %p36
      %p38 = scmp.ne.s32.totalorder %s24, %s25
      %p39 = scmp.eq.s32.totalorder %s17, 1
      %p40 = por %p38, %p39
      %p42 = scmp.ne.s32.totalorder %s25, %s41
      %p43 = scmp.eq.s32.totalorder %s17, 0
      %p44 = por %p42, %p43
      %s46 = sadd.s32 %s45, 1
      %p49 = scmp.eq.s32.totalorder %s11, 1
      %p50 = scmp.ne.s32.totalorder %s45, %s47
      %p51 = scmp.eq.s32.totalorder %s11, 0
      %p52 = por %p50, %p51
      %p53 = scmp.ne.s32.totalorder %s45, %s47
      %p54 = scmp.eq.s32.totalorder %s16, 1
      %p55 = por %p53, %p54
      %p56 = scmp.ne.s32.totalorder %s47, %s48
      %p57 = scmp.eq.s32.totalorder %s16, 0
      %p58 = por %p56, %p57
      %p59 = scmp.ne.s32.totalorder %s47, %s48
      %p60 = scmp.eq.s32.totalorder %s17, 1
      %p61 = por %p59, %p60
      %p63 = scmp.ne.s32.totalorder %s48, %s62
      %p64 = scmp.eq.s32.totalorder %s17, 0
      %p65 = por %p63, %p64
      %s67 = sadd.s32 %s66, 1
      %p70 = scmp.eq.s32.totalorder %s11, 1
      %p71 = scmp.ne.s32.totalorder %s66, %s68
      %p72 = scmp.eq.s32.totalorder %s11, 0
      %p73 = por %p71, %p72
      %p74 = scmp.ne.s32.totalorder %s66, %s68
      %p75 = scmp.eq.s32.totalorder %s16, 1
      %p76 = por %p74, %p75
      %p77 = scmp.ne.s32.totalorder %s68, %s69
      %p78 = scmp.eq.s32.totalorder %s16, 0
      %p79 = por %p77, %p78
      %p80 = scmp.ne.s32.totalorder %s68, %s69
      %p81 = scmp.eq.s32.totalorder %s17, 1
      %p82 = por %p80, %p81
      %p84 = scmp.ne.s32.totalorder %s69, %s83
      %p85 = scmp.eq.s32.totalorder %s17, 0
      %p86 = por %p84, %p85
      %s87 = ssub.s32 %s11, %s18
      %p88 = scmp.eq.s32.totalorder %s87, 0
      %s90 = sadd.s32 %s89, 1
      %s91 = scalar_select %p88, %s89, %s90
      %p94 = pneg %p88
      %p95 = scmp.eq.s32.totalorder %s11, 1
      %p96 = por %p94, %p95
      %p97 = scmp.ne.s32.totalorder %s89, %s92
      %p98 = scmp.eq.s32.totalorder %s11, 0
      %p99 = por %p97, %p98
      %p100 = scmp.ne.s32.totalorder %s89, %s92
      %p101 = scmp.eq.s32.totalorder %s16, 1
      %p102 = por %p100, %p101
      %p103 = scmp.ne.s32.totalorder %s92, %s93
      %p104 = scmp.eq.s32.totalorder %s16, 0
      %p105 = por %p103, %p104
      %p106 = scmp.ne.s32.totalorder %s92, %s93
      %p107 = scmp.eq.s32.totalorder %s17, 1
      %p108 = por %p106, %p107
      %p110 = scmp.ne.s32.totalorder %s93, %s109
      %p111 = scmp.eq.s32.totalorder %s17, 0
      %p112 = por %p110, %p111
      %s113 = ssub.s32 %s11, %s18
      %p114 = scmp.eq.s32.totalorder %s113, 0
      %s116 = sadd.s32 %s115, 1
      %s117 = scalar_select %p114, %s115, %s116
      %p120 = pneg %p114
      %p121 = scmp.eq.s32.totalorder %s11, 1
      %p122 = por %p120, %p121
      %p123 = scmp.ne.s32.totalorder %s115, %s118
      %p124 = scmp.eq.s32.totalorder %s11, 0
      %p125 = por %p123, %p124
      %p126 = scmp.ne.s32.totalorder %s115, %s118
      %p127 = scmp.eq.s32.totalorder %s16, 1
      %p128 = por %p126, %p127
      %p129 = scmp.ne.s32.totalorder %s118, %s119
      %p130 = scmp.eq.s32.totalorder %s16, 0
      %p131 = por %p129, %p130
      %p132 = scmp.ne.s32.totalorder %s118, %s119
      %p133 = scmp.eq.s32.totalorder %s17, 1
      %p134 = por %p132, %p133
      %p136 = scmp.ne.s32.totalorder %s119, %s135
      %p137 = scmp.eq.s32.totalorder %s17, 0
      %p138 = por %p136, %p137
      %p139 = scmp.le.s32.totalorder 1, %s11
      %p140 = scmp.lt.s32.totalorder %s11, 3
      %p141 = pnand %p139, %p140
      %p142 = pneg %p141
      // Predicated region
      $region9: #{decode_block_forward.2} parent=5 // pred_check
        _
      $region10: #{decode_block_forward.2} parent=5 // pred_check_branch
        %144 = sbr.rel (%p141) target = $region12
      $region11: #{decode_block_forward.2} parent=5 // pred_region
        %s145 = ssub.s32 %s11, 1
        // Predicated region
        $region13: #{decode_block_forward.2} parent=11 // pred_check
          %p146 = pneg %p58
        $region14: #{decode_block_forward.2} parent=11 // pred_check_branch
          %148 = sbr.rel (%p146) target = $region16
        $region15: #{decode_block_forward.2} parent=11 // pred_region
          _
        $region16: #{decode_block_forward.2} parent=11 // pred_fallthru
          _
        // Predicated region
        $region17: #{decode_block_forward.2} parent=11 // pred_check
          %p149 = pneg %p79
        $region18: #{decode_block_forward.2} parent=11 // pred_check_branch
          %151 = sbr.rel (%p149) target = $region20
        $region19: #{decode_block_forward.2} parent=11 // pred_region
          _
        $region20: #{decode_block_forward.2} parent=11 // pred_fallthru
          _
      $region12: #{decode_block_forward.2} parent=5 // pred_fallthru
        _
      %p152 = scmp.lt.s32.totalorder %s11, 2
      // Predicated region
      $region21: #{decode_block_forward.2} parent=5 // pred_check
        %p153 = pneg %p152
      $region22: #{decode_block_forward.2} parent=5 // pred_check_branch
        %155 = sbr.rel (%p153) target = $region24
      $region23: #{decode_block_forward.2} parent=5 // pred_region
        // Predicated region
        $region25: #{decode_block_forward.2} parent=23 // pred_check
          %p156 = pneg %p31
        $region26: #{decode_block_forward.2} parent=23 // pred_check_branch
          %158 = sbr.rel (%p156) target = $region28
        $region27: #{decode_block_forward.2} parent=23 // pred_region
          %p159 = scmp.lt.s32.totalorder %s11, 1
          %s160 = scalar_select %p159, %s11, 1
          %s161 = smul.addr %s160, 2
          %s162 = smul.addr %s161, 4
          %s163 = scalar_lea.vmem %s0, %s162
        $region28: #{decode_block_forward.2} parent=23 // pred_fallthru
          _
      $region24: #{decode_block_forward.2} parent=5 // pred_fallthru
        _
      %p164 = scmp.le.s32.totalorder 1, %s11
      %p165 = scmp.lt.s32.totalorder %s11, 3
      %p166 = pnand %p164, %p165
      %p167 = pneg %p166
      // Predicated region
      $region29: #{decode_block_forward.2} parent=5 // pred_check
        _
      $region30: #{decode_block_forward.2} parent=5 // pred_check_branch
        %169 = sbr.rel (%p166) target = $region32
      $region31: #{decode_block_forward.2} parent=5 // pred_region
        %s170 = ssub.s32 %s11, 1
        %p171 = scmp.lt.s32.totalorder %s16, 1
        %s172 = scalar_select %p171, %s16, 1
        %s173 = smul.addr %s172, 2
        %s174 = smul.addr %s173, 4
        %s175 = scalar_lea.vmem %s0, %s174
        %p176 = pneg %p37
        %p177 = pneg %p34
        %p178 = pneg %p58
        %p179 = pneg %p55
        %p180 = pneg %p79
        %p181 = pneg %p76
        %p182 = pneg %p105
        %p183 = pneg %p102
        %s184 = sand.u32 %s92, 1
        %s185 = sand.u32 %s92, 1
        %s186 = smul.addr %s185, 16
        %s187 = scalar_lea.vmem [#allocation2], %s186
        %p188 = pneg %p131
        %p189 = pneg %p128
        %p190 = scmp.lt.s32.totalorder %s16, 1
        %s191 = scalar_select %p190, %s16, 1
        %s192 = smul.addr %s191, 2
        %s193 = scalar_lea.vmem %s4, %s192
        %p194 = scmp.lt.s32.totalorder %s16, 1
        %s195 = scalar_select %p194, %s16, 1
        %s196 = smul.addr %s195, 2
        %s197 = smul.addr %s196, 4
        %s198 = scalar_lea.vmem %s0, %s197
        %p199 = scmp.lt.s32.totalorder %s16, 1
        %s200 = scalar_select %p199, %s16, 1
        %s201 = smul.addr %s200, 2
        %s202 = scalar_lea.vmem %s4, %s201
        %v203 = vld [vmem:[%s2] sm:$0x1]
        %v204 = vld [vmem:[%s1] sm:$0xff]
        %v205 = vld [vmem:[%s1 + $0x8] sm:$0xff]
        %v206 = vld [vmem:[%s1 + $0x10] sm:$0xff]
        %v207 = vld [vmem:[%s1 + $0x18] sm:$0xff]
        %v208 = vld [vmem:[%s1 + $0x20] sm:$0xff]
        %s209 = scalar_lea.vmem %s1, 40
        %v210 = vld [vmem:[%s209] sm:$0xff]
        %v211 = vld [vmem:[%s209 + $0x8] sm:$0xff]
        %v212 = vld [vmem:[%s209 + $0x10] sm:$0xff]
        %v213 = vld [vmem:[%s209 + $0x18] sm:$0xff]
        %v214 = vld [vmem:[%s209 + $0x20] sm:$0xff]
        %s215 = scalar_lea.vmem %s1, 80
        %v216 = vld [vmem:[%s215] sm:$0xff]
        %v217 = vld [vmem:[%s215 + $0x8] sm:$0xff]
        %v218 = vld [vmem:[%s215 + $0x10] sm:$0xff]
        %v219 = vld [vmem:[%s215 + $0x18] sm:$0xff]
        %v220 = vld [vmem:[%s215 + $0x20] sm:$0xff]
        %s221 = scalar_lea.vmem %s1, 120
        %v222 = vld [vmem:[%s221] sm:$0xff]
        %v223 = vld [vmem:[%s221 + $0x8] sm:$0xff]
        %v224 = vld [vmem:[%s221 + $0x10] sm:$0xff]
        %v225 = vld [vmem:[%s221 + $0x18] sm:$0xff]
        %v226 = vld [vmem:[%s221 + $0x20] sm:$0xff]
        %v227 = vld [vmem:[%s198] sm:$0xf]
        %v228 = vld [vmem:[%s198 + $0x4] sm:$0x1]
        %v229 = vunpack.c.l.bf16 %v227
        %v230 = vunpack.c.l.bf16 %v228
        %vm233 = vcmask 1046528
        %v234 = vrot.slane %v229, 1
        %v235 = vrot.slane %v230, 1
        %v236 = vsel %vm233, %v234, %v235
        %vm237 = vcmask 326656
        %v238 = vsel %vm237, %v236, 0
        %240 = vmatprep.subr.mxu0 0.0
        %241 = vmatpush1.msra.mxu0 %v210
        %242 = vmatprep.subr.mxu0 0.0
        %243 = vmatpush1.msra.mxu0 %v211
        %244 = vmatprep.subr.mxu0 0.0
        %245 = vmatpush1.msra.mxu0 %v212
        %246 = vmatprep.subr.mxu0 0.0
        %247 = vmatpush1.msra.mxu0 %v213
        %248 = vmatprep.subr.mxu0 0.0
        %249 = vmatpush1.msra.mxu0 %v214
        %250 = vmatprep.subr.mxu0 0.0
        %251 = vmatpush1.msra.mxu0 0.0
        %252 = vmatprep.subr.mxu0 0.0
        %253 = vmatpush1.msra.mxu0 0.0
        %254 = vmatprep.subr.mxu0 0.0
        %255 = vmatpush1.msra.mxu0 0.0
        %256 = vmatprep.subr.mxu0 0.0
        %257 = vmatpush1.msra.mxu0 0.0
        %258 = vmatprep.subr.mxu0 0.0
        %259 = vmatpush1.msra.mxu0 0.0
        %260 = vmatprep.subr.mxu0 0.0
        %261 = vmatpush1.msra.mxu0 0.0
        %262 = vmatprep.subr.mxu0 0.0
        %263 = vmatpush1.msra.mxu0 0.0
        %264 = vmatprep.subr.mxu0 0.0
        %265 = vmatpush1.msra.mxu0 0.0
        %266 = vmatprep.subr.mxu0 0.0
        %267 = vmatpush1.msra.mxu0 0.0
        %268 = vmatprep.subr.mxu0 0.0
        %269 = vmatpush1.msra.mxu0 0.0
        %270 = vmatprep.subr.mxu0 0.0
        %271 = vmatpush1.msra.mxu0 0.0
        %272 = vmatprep.subr.mxu0 0.0
        %273 = vmatpush1.msra.mxu0 0.0
        %274 = vmatprep.subr.mxu0 0.0
        %275 = vmatpush1.msra.mxu0 0.0
        %276 = vmatprep.subr.mxu0 0.0
        %277 = vmatpush1.msra.mxu0 0.0
        %278 = vmatprep.subr.mxu0 0.0
        %279 = vmatpush1.msra.mxu0 0.0
        %280 = vmatprep.subr.mxu0 0.0
        %281 = vmatpush1.msra.mxu0 0.0
        %282 = vmatprep.subr.mxu0 0.0
        %283 = vmatpush1.msra.mxu0 0.0
        %284 = vmatprep.subr.mxu0 0.0
        %285 = vmatpush1.msra.mxu0 0.0
        %286 = vmatprep.subr.mxu0 0.0
        %287 = vmatpush1.msra.mxu0 0.0
        %288 = vmatprep.subr.mxu0 0.0
        %289 = vmatpush1.msra.mxu0 0.0
        %290 = vmatprep.subr.mxu0 0.0
        %291 = vmatpush1.msra.mxu0 0.0
        %292 = vmatprep.subr.mxu0 0.0
        %293 = vmatpush1.msra.mxu0 0.0
        %294 = vmatprep.subr.mxu0 0.0
        %295 = vmatpush1.msra.mxu0 0.0
        %296 = vmatprep.subr.mxu0 0.0
        %297 = vmatpush1.msra.mxu0 0.0
        %298 = vmatprep.subr.mxu0 0.0
        %299 = vmatpush1.msra.mxu0 0.0
        %300 = vmatprep.subr.mxu0 0.0
        %301 = vmatpush1.msra.mxu0 0.0
        %302 = vmatprep.subr.mxu0 0.0
        %303 = vmatpush1.msra.mxu0 0.0
        %304 = vmatprep.mubr.f32.mxu0 0.0
        %305 = vmatmul.mubr.f32.gmra.mrb[0].mxu0 %v238
        %v306 = vpop.f32.mrb[0].mxu0
        %v307 = vadd.f32 0.0, %v306
        %v308 = vpop.f32.mrb[0].mxu0
        %309 = vdwg.mxu0
        %v310 = vsel %vm237, %v229, 0
        %312 = vmatprep.subr.mxu0 0.0
        %313 = vmatpush1.msra.mxu0 %v204
        %314 = vmatprep.subr.mxu0 0.0
        %315 = vmatpush1.msra.mxu0 %v205
        %316 = vmatprep.subr.mxu0 0.0
        %317 = vmatpush1.msra.mxu0 %v206
        %318 = vmatprep.subr.mxu0 0.0
        %319 = vmatpush1.msra.mxu0 %v207
        %320 = vmatprep.subr.mxu0 0.0
        %321 = vmatpush1.msra.mxu0 %v208
        %322 = vmatprep.subr.mxu0 0.0
        %323 = vmatpush1.msra.mxu0 0.0
        %324 = vmatprep.subr.mxu0 0.0
        %325 = vmatpush1.msra.mxu0 0.0
        %326 = vmatprep.subr.mxu0 0.0
        %327 = vmatpush1.msra.mxu0 0.0
        %328 = vmatprep.subr.mxu0 0.0
        %329 = vmatpush1.msra.mxu0 0.0
        %330 = vmatprep.subr.mxu0 0.0
        %331 = vmatpush1.msra.mxu0 0.0
        %332 = vmatprep.subr.mxu0 0.0
        %333 = vmatpush1.msra.mxu0 0.0
        %334 = vmatprep.subr.mxu0 0.0
        %335 = vmatpush1.msra.mxu0 0.0
        %336 = vmatprep.subr.mxu0 0.0
        %337 = vmatpush1.msra.mxu0 0.0
        %338 = vmatprep.subr.mxu0 0.0
        %339 = vmatpush1.msra.mxu0 0.0
        %340 = vmatprep.subr.mxu0 0.0
        %341 = vmatpush1.msra.mxu0 0.0
        %342 = vmatprep.subr.mxu0 0.0
        %343 = vmatpush1.msra.mxu0 0.0
        %344 = vmatprep.subr.mxu0 0.0
        %345 = vmatpush1.msra.mxu0 0.0
        %346 = vmatprep.subr.mxu0 0.0
        %347 = vmatpush1.msra.mxu0 0.0
        %348 = vmatprep.subr.mxu0 0.0
        %349 = vmatpush1.msra.mxu0 0.0
        %350 = vmatprep.subr.mxu0 0.0
        %351 = vmatpush1.msra.mxu0 0.0
        %352 = vmatprep.subr.mxu0 0.0
        %353 = vmatpush1.msra.mxu0 0.0
        %354 = vmatprep.subr.mxu0 0.0
        %355 = vmatpush1.msra.mxu0 0.0
        %356 = vmatprep.subr.mxu0 0.0
        %357 = vmatpush1.msra.mxu0 0.0
        %358 = vmatprep.subr.mxu0 0.0
        %359 = vmatpush1.msra.mxu0 0.0
        %360 = vmatprep.subr.mxu0 0.0
        %361 = vmatpush1.msra.mxu0 0.0
        %362 = vmatprep.subr.mxu0 0.0
        %363 = vmatpush1.msra.mxu0 0.0
        %364 = vmatprep.subr.mxu0 0.0
        %365 = vmatpush1.msra.mxu0 0.0
        %366 = vmatprep.subr.mxu0 0.0
        %367 = vmatpush1.msra.mxu0 0.0
        %368 = vmatprep.subr.mxu0 0.0
        %369 = vmatpush1.msra.mxu0 0.0
        %370 = vmatprep.subr.mxu0 0.0
        %371 = vmatpush1.msra.mxu0 0.0
        %372 = vmatprep.subr.mxu0 0.0
        %373 = vmatpush1.msra.mxu0 0.0
        %374 = vmatprep.subr.mxu0 0.0
        %375 = vmatpush1.msra.mxu0 0.0
        %376 = vmatprep.mubr.f32.mxu0 0.0
        %377 = vmatmul.mubr.f32.gmra.mrb[0].mxu0 %v310
        %v378 = vpop.f32.mrb[0].mxu0
        %v379 = vadd.f32 %v307, %v378
        %v380 = vpop.f32.mrb[0].mxu0
        %381 = vdwg.mxu0
        %v383 = vlaneseq
        %v384 = vshrl.u32 %v383, 7
        %v385 = vsub.s32 0, %v384
        %v386 = vrot.slane %v203, %v385
        %v388 = vadd.f32 %v379, %v386
        %389 = vst [vmem:[%s187] sm:$0xff] %v388
        %v390 = vrot.slane %v388, 4
        %v391 = vadd.f32 %v388, %v390
        %v392 = vrot.slane %v391, 2
        %v393 = vadd.f32 %v391, %v392
        %v394 = vrot.slane %v393, 1
        %v395 = vadd.f32 %v393, %v394
        %v396 = vadd.f32 %v395, 0.0
        %v397 = vmul.f32 %v388, %v388
        %v398 = vrot.slane %v397, 4
        %v399 = vadd.f32 %v397, %v398
        %v400 = vrot.slane %v399, 2
        %v401 = vadd.f32 %v399, %v400
        %v402 = vrot.slane %v401, 1
        %v403 = vadd.f32 %v401, %v402
        %v404 = vadd.f32 %v403, 0.0
        %vm405 = vcmask 1045504
        %v406 = vrot.slane %v229, 2
        %v407 = vrot.slane %v230, 2
        %v408 = vsel %vm405, %v406, %v407
        %v409 = vsel %vm237, %v408, 0
        %411 = vmatprep.subr.mxu0 0.0
        %412 = vmatpush1.msra.mxu0 %v222
        %413 = vmatprep.subr.mxu0 0.0
        %414 = vmatpush1.msra.mxu0 %v223
        %415 = vmatprep.subr.mxu0 0.0
        %416 = vmatpush1.msra.mxu0 %v224
        %417 = vmatprep.subr.mxu0 0.0
        %418 = vmatpush1.msra.mxu0 %v225
        %419 = vmatprep.subr.mxu0 0.0
        %420 = vmatpush1.msra.mxu0 %v226
        %421 = vmatprep.subr.mxu0 0.0
        %422 = vmatpush1.msra.mxu0 0.0
        %423 = vmatprep.subr.mxu0 0.0
        %424 = vmatpush1.msra.mxu0 0.0
        %425 = vmatprep.subr.mxu0 0.0
        %426 = vmatpush1.msra.mxu0 0.0
        %427 = vmatprep.subr.mxu0 0.0
        %428 = vmatpush1.msra.mxu0 0.0
        %429 = vmatprep.subr.mxu0 0.0
        %430 = vmatpush1.msra.mxu0 0.0
        %431 = vmatprep.subr.mxu0 0.0
        %432 = vmatpush1.msra.mxu0 0.0
        %433 = vmatprep.subr.mxu0 0.0
        %434 = vmatpush1.msra.mxu0 0.0
        %435 = vmatprep.subr.mxu0 0.0
        %436 = vmatpush1.msra.mxu0 0.0
        %437 = vmatprep.subr.mxu0 0.0
        %438 = vmatpush1.msra.mxu0 0.0
        %439 = vmatprep.subr.mxu0 0.0
        %440 = vmatpush1.msra.mxu0 0.0
        %441 = vmatprep.subr.mxu0 0.0
        %442 = vmatpush1.msra.mxu0 0.0
        %443 = vmatprep.subr.mxu0 0.0
        %444 = vmatpush1.msra.mxu0 0.0
        %445 = vmatprep.subr.mxu0 0.0
        %446 = vmatpush1.msra.mxu0 0.0
        %447 = vmatprep.subr.mxu0 0.0
        %448 = vmatpush1.msra.mxu0 0.0
        %449 = vmatprep.subr.mxu0 0.0
        %450 = vmatpush1.msra.mxu0 0.0
        %451 = vmatprep.subr.mxu0 0.0
        %452 = vmatpush1.msra.mxu0 0.0
        %453 = vmatprep.subr.mxu0 0.0
        %454 = vmatpush1.msra.mxu0 0.0
        %455 = vmatprep.subr.mxu0 0.0
        %456 = vmatpush1.msra.mxu0 0.0
        %457 = vmatprep.subr.mxu0 0.0
        %458 = vmatpush1.msra.mxu0 0.0
        %459 = vmatprep.subr.mxu0 0.0
        %460 = vmatpush1.msra.mxu0 0.0
        %461 = vmatprep.subr.mxu0 0.0
        %462 = vmatpush1.msra.mxu0 0.0
        %463 = vmatprep.subr.mxu0 0.0
        %464 = vmatpush1.msra.mxu0 0.0
        %465 = vmatprep.subr.mxu0 0.0
        %466 = vmatpush1.msra.mxu0 0.0
        %467 = vmatprep.subr.mxu0 0.0
        %468 = vmatpush1.msra.mxu0 0.0
        %469 = vmatprep.subr.mxu0 0.0
        %470 = vmatpush1.msra.mxu0 0.0
        %471 = vmatprep.subr.mxu0 0.0
        %472 = vmatpush1.msra.mxu0 0.0
        %473 = vmatprep.subr.mxu0 0.0
        %474 = vmatpush1.msra.mxu0 0.0
        %475 = vmatprep.mubr.f32.mxu0 0.0
        %476 = vmatmul.mubr.f32.gmra.mrb[0].mxu0 %v409
        %v477 = vpop.f32.mrb[0].mxu0
        %v478 = vadd.f32 0.0, %v477
        %v479 = vpop.f32.mrb[0].mxu0
        %480 = vdwg.mxu0
        %481 = vmatprep.subr.mxu0 0.0
        %482 = vmatpush1.msra.mxu0 %v216
        %483 = vmatprep.subr.mxu0 0.0
        %484 = vmatpush1.msra.mxu0 %v217
        %485 = vmatprep.subr.mxu0 0.0
        %486 = vmatpush1.msra.mxu0 %v218
        %487 = vmatprep.subr.mxu0 0.0
        %488 = vmatpush1.msra.mxu0 %v219
        %489 = vmatprep.subr.mxu0 0.0
        %490 = vmatpush1.msra.mxu0 %v220
        %491 = vmatprep.subr.mxu0 0.0
        %492 = vmatpush1.msra.mxu0 0.0
        %493 = vmatprep.subr.mxu0 0.0
        %494 = vmatpush1.msra.mxu0 0.0
        %495 = vmatprep.subr.mxu0 0.0
        %496 = vmatpush1.msra.mxu0 0.0
        %497 = vmatprep.subr.mxu0 0.0
        %498 = vmatpush1.msra.mxu0 0.0
        %499 = vmatprep.subr.mxu0 0.0
        %500 = vmatpush1.msra.mxu0 0.0
        %501 = vmatprep.subr.mxu0 0.0
        %502 = vmatpush1.msra.mxu0 0.0
        %503 = vmatprep.subr.mxu0 0.0
        %504 = vmatpush1.msra.mxu0 0.0
        %505 = vmatprep.subr.mxu0 0.0
        %506 = vmatpush1.msra.mxu0 0.0
        %507 = vmatprep.subr.mxu0 0.0
        %508 = vmatpush1.msra.mxu0 0.0
        %509 = vmatprep.subr.mxu0 0.0
        %510 = vmatpush1.msra.mxu0 0.0
        %511 = vmatprep.subr.mxu0 0.0
        %512 = vmatpush1.msra.mxu0 0.0
        %513 = vmatprep.subr.mxu0 0.0
        %514 = vmatpush1.msra.mxu0 0.0
        %515 = vmatprep.subr.mxu0 0.0
        %516 = vmatpush1.msra.mxu0 0.0
        %517 = vmatprep.subr.mxu0 0.0
        %518 = vmatpush1.msra.mxu0 0.0
        %519 = vmatprep.subr.mxu0 0.0
        %520 = vmatpush1.msra.mxu0 0.0
        %521 = vmatprep.subr.mxu0 0.0
        %522 = vmatpush1.msra.mxu0 0.0
        %523 = vmatprep.subr.mxu0 0.0
        %524 = vmatpush1.msra.mxu0 0.0
        %525 = vmatprep.subr.mxu0 0.0
        %526 = vmatpush1.msra.mxu0 0.0
        %527 = vmatprep.subr.mxu0 0.0
        %528 = vmatpush1.msra.mxu0 0.0
        %529 = vmatprep.subr.mxu0 0.0
        %530 = vmatpush1.msra.mxu0 0.0
        %531 = vmatprep.subr.mxu0 0.0
        %532 = vmatpush1.msra.mxu0 0.0
        %533 = vmatprep.subr.mxu0 0.0
        %534 = vmatpush1.msra.mxu0 0.0
        %535 = vmatprep.subr.mxu0 0.0
        %536 = vmatpush1.msra.mxu0 0.0
        %537 = vmatprep.subr.mxu0 0.0
        %538 = vmatpush1.msra.mxu0 0.0
        %539 = vmatprep.subr.mxu0 0.0
        %540 = vmatpush1.msra.mxu0 0.0
        %541 = vmatprep.subr.mxu0 0.0
        %542 = vmatpush1.msra.mxu0 0.0
        %543 = vmatprep.subr.mxu0 0.0
        %544 = vmatpush1.msra.mxu0 0.0
        %545 = vmatprep.mubr.f32.mxu0 0.0
        %546 = vmatmul.mubr.f32.gmra.mrb[0].mxu0 %v238
        %v547 = vpop.f32.mrb[0].mxu0
        %v548 = vadd.f32 %v478, %v547
        %v549 = vpop.f32.mrb[0].mxu0
        %550 = vdwg.mxu0
        %v551 = vadd.f32 %v548, %v386
        %s552 = scalar_lea.vmem %s187, 8 [#allocation2]
        %553 = vst [vmem:[%s552] sm:$0xff] %v551
        %v554 = vrot.slane %v551, 4
        %v555 = vadd.f32 %v551, %v554
        %v556 = vrot.slane %v555, 2
        %v557 = vadd.f32 %v555, %v556
        %v558 = vrot.slane %v557, 1
        %v559 = vadd.f32 %v557, %v558
        %v560 = vadd.f32 %v396, %v559
        %v561 = vmul.f32 %v551, %v551
        %v562 = vrot.slane %v561, 4
        %v563 = vadd.f32 %v561, %v562
        %v564 = vrot.slane %v563, 2
        %v565 = vadd.f32 %v563, %v564
        %v566 = vrot.slane %v565, 1
        %v567 = vadd.f32 %v565, %v566
        %v568 = vadd.f32 %v404, %v567
        %569 = vst [vmem:[%s202] sm:$0x1] %v560
        %570 = vst [vmem:[%s202 + $0x1] sm:$0x1] %v568
        %s571 = sand.u32 %s92, 1
        %s572 = sand.u32 %s92, 1
        %s573 = smul.addr %s572, 16
        %s574 = scalar_lea.vmem [#allocation2], %s573
        %p575 = scmp.lt.s32.totalorder %s16, 1
        %s576 = scalar_select %p575, %s16, 1
        %s577 = smul.addr %s576, 2
        %s578 = scalar_lea.vmem %s4, %s577
        // Predicated region
        $region33: #{decode_block_forward.2} parent=31 // pred_check
          %p579 = pneg %p102
        $region34: #{decode_block_forward.2} parent=31 // pred_check_branch
          %581 = sbr.rel (%p579) target = $region36
        $region35: #{decode_block_forward.2} parent=31 // pred_region
          %s582 = smul.addr %s16, 8
          %s583 = scalar_lea.vmem %s3, %s582
          // Predicated region
          $region37: #{decode_block_forward.2} parent=35 // pred_check
            _
          $region38: #{decode_block_forward.2} parent=35 // pred_check_branch
            %585 = sbr.rel (0) target = $region40
          $region39: #{decode_block_forward.2} parent=35 // pred_region
            // Predicated region
            $region41: #{decode_block_forward.2} parent=39 // pred_check
              _
            $region42: #{decode_block_forward.2} parent=39 // pred_check_branch
              %587 = sbr.rel (0) target = $region44
            $region43: #{decode_block_forward.2} parent=39 // pred_region
              // Predicated region
              $region56: #{decode_block_forward.2} parent=43 // pred_check
                _
              $region57: #{decode_block_forward.2} parent=43 // pred_check_branch
                %604 = sbr.rel (0) target = $region59
              $region58: #{decode_block_forward.2} parent=43 // pred_region
                loop: start=0, step=1, limit=1
                $region60: #{decode_block_forward.2} parent=58 // loop_pre_header
                  _
                $region61: #{decode_block_forward.2} parent=58 // loop_header
                  %s606 = sphi 0, %s610
                  %p607 = scmp.ge.s32.totalorder %s606, 1
                  %s611 = sphi %s574, %s574
                  %s612 = sphi %s583, %s583
                $region62: #{decode_block_forward.2} parent=58 // loop_header_branch
                  %609 = sbr.rel (%p607) target = $region66
                $region63: #{decode_block_forward.2} parent=58 // loop_body
                  %v613 = vld [vmem:[%s611] sm:$0xff]
                  %614 = vst [vmem:[%s612] sm:$0xff] %v613
                  %v615 = vld [vmem:[%s611 + $0x8] sm:$0xff]
                  %616 = vst [vmem:[%s612 + $0x10] sm:$0xff] %v615
                $region64: #{decode_block_forward.2} parent=58 // loop_footer
                  %s610 = sadd.s32 1, %s606
                $region65: #{decode_block_forward.2} parent=58 // loop_footer_branch
                  %605 = sbr.rel target = $region61
                $region66: #{decode_block_forward.2} parent=58 // loop_exit
                  _
              $region59: #{decode_block_forward.2} parent=43 // pred_fallthru
                _
              // Predicated region
              $region67: #{decode_block_forward.2} parent=43 // pred_check
                _
              $region68: #{decode_block_forward.2} parent=43 // pred_check_branch
                %618 = sbr.rel target = $region70
              $region69: #{decode_block_forward.2} parent=43 // pred_region
                _
              $region70: #{decode_block_forward.2} parent=43 // pred_fallthru
                _
            $region44: #{decode_block_forward.2} parent=39 // pred_fallthru
              _
            // Predicated region
            $region45: #{decode_block_forward.2} parent=39 // pred_check
              _
            $region46: #{decode_block_forward.2} parent=39 // pred_check_branch
              %589 = sbr.rel target = $region48
            $region47: #{decode_block_forward.2} parent=39 // pred_region
              loop: start=0, step=1, limit=1
              $region49: #{decode_block_forward.2} parent=47 // loop_pre_header
                _
              $region50: #{decode_block_forward.2} parent=47 // loop_header
                %s592 = sphi 0, %s596
                %p593 = scmp.ge.s32.totalorder %s592, 1
                %s597 = sphi %s574, %s574
                %s598 = sphi %s583, %s583
              $region51: #{decode_block_forward.2} parent=47 // loop_header_branch
                %595 = sbr.rel (%p593) target = $region55
              $region52: #{decode_block_forward.2} parent=47 // loop_body
                %v599 = vld [vmem:[%s597] sm:$0xff]
                %600 = vst [vmem:[%s598] sm:$0xff] %v599
                %v601 = vld [vmem:[%s597 + $0x8] sm:$0xff]
                %602 = vst [vmem:[%s598 + $0x10] sm:$0xff] %v601
              $region53: #{decode_block_forward.2} parent=47 // loop_footer
                %s596 = sadd.s32 1, %s592
              $region54: #{decode_block_forward.2} parent=47 // loop_footer_branch
                %591 = sbr.rel target = $region50
              $region55: #{decode_block_forward.2} parent=47 // loop_exit
                _
            $region48: #{decode_block_forward.2} parent=39 // pred_fallthru
              _
          $region40: #{decode_block_forward.2} parent=35 // pred_fallthru
            _
          %619 = vnop
        $region36: #{decode_block_forward.2} parent=31 // pred_fallthru
          _
        // Predicated region
        $region71: #{decode_block_forward.2} parent=31 // pred_check
          %p620 = pneg %p128
        $region72: #{decode_block_forward.2} parent=31 // pred_check_branch
          %622 = sbr.rel (%p620) target = $region74
        $region73: #{decode_block_forward.2} parent=31 // pred_region
          _
        $region74: #{decode_block_forward.2} parent=31 // pred_fallthru
          _
      $region32: #{decode_block_forward.2} parent=5 // pred_fallthru
        _
      %p623 = scmp.le.s32.totalorder 2, %s11
      // Predicated region
      $region75: #{decode_block_forward.2} parent=5 // pred_check
        %p624 = pneg %p623
      $region76: #{decode_block_forward.2} parent=5 // pred_check_branch
        %626 = sbr.rel (%p624) target = $region78
      $region77: #{decode_block_forward.2} parent=5 // pred_region
        %s627 = ssub.s32 %s11, 2
        // Predicated region
        $region79: #{decode_block_forward.2} parent=77 // pred_check
          %p628 = pneg %p108
        $region80: #{decode_block_forward.2} parent=77 // pred_check_branch
          %630 = sbr.rel (%p628) target = $region82
        $region81: #{decode_block_forward.2} parent=77 // pred_region
          %s631 = sand.u32 %s93, 1
          %s632 = sand.u32 %s93, 1
          %s633 = smul.addr %s632, 16
          %s634 = scalar_lea.vmem [#allocation2], %s633
        $region82: #{decode_block_forward.2} parent=77 // pred_fallthru
          _
        // Predicated region
        $region83: #{decode_block_forward.2} parent=77 // pred_check
          %p635 = pneg %p134
        $region84: #{decode_block_forward.2} parent=77 // pred_check_branch
          %637 = sbr.rel (%p635) target = $region86
        $region85: #{decode_block_forward.2} parent=77 // pred_region
          %p638 = scmp.lt.s32.totalorder %s17, 1
          %s639 = scalar_select %p638, %s17, 1
          %s640 = smul.addr %s639, 2
          %s641 = scalar_lea.vmem %s4, %s640
        $region86: #{decode_block_forward.2} parent=77 // pred_fallthru
          _
      $region78: #{decode_block_forward.2} parent=5 // pred_fallthru
        _
    $region6: #{decode_block_forward.2} parent=1 // loop_footer
      %s15 = sadd.s32 1, %s11
    $region7: #{decode_block_forward.2} parent=1 // loop_footer_branch
      %10 = sbr.rel target = $region3
    $region8: #{decode_block_forward.2} parent=1 // loop_exit
      _

</llo_original>
